<compile_context>
chip_gen: v7x
topology: tpu7x:2x2x1
jax: 0.10.0
libtpu: 0.0.40
codegen_flags: <defaults>
</compile_context>

<pallas_src>
import functools

import jax
import jax.numpy as jnp
from jax import lax
from jax.experimental import pallas as pl
from jax.experimental.pallas import tpu as pltpu


# ---------------------------------------------------------------------------
# Tiling plan
# ---------------------------------------------------------------------------
def _round_up(x, m):
    return ((x + m - 1) // m) * m


def _vmem_bytes_per_batch(n, d, itemsize=4):
    """Rough per-batch-element VMEM footprint inside the kernel (f32, lane-padded)."""
    lane = 128
    x_rows = n * _round_up(d, lane) * itemsize       # x / mapped rows
    adj_tile = n * _round_up(n, lane) * itemsize     # one (N, N) tile
    out_tile = adj_tile
    # 2x double-buffered input + output blocks, plus `mapped` and ~3 live
    # adj-sized temporaries (adj, exp, softmax result).
    return 2 * (x_rows + out_tile) + x_rows + 3 * adj_tile


def _plan_batch_tile(bs, n, d, vmem_budget_bytes):
    """Pick (Bt, bs_padded): biggest batch tile that fits the VMEM budget."""
    per_batch = _vmem_bytes_per_batch(n, d)
    bt_cap = max(1, vmem_budget_bytes // per_batch)
    if bs <= bt_cap:
        # Single grid step; block == full (padded) array so the (8,128) block
        # divisibility rule is satisfied by "equals full dim".
        return bs, bs
    steps = pl.cdiv(bs, bt_cap)
    bt = _round_up(pl.cdiv(bs, steps), 8)            # keep (Bt*N) % 8 == 0 for any N
    return bt, _round_up(bs, bt)


# ---------------------------------------------------------------------------
# Kernel
# ---------------------------------------------------------------------------
def _dot_graph_kernel(x_ref, w_ref, b_ref, o_ref, *, n):
    # x_ref: (Bt*N, D)   w_ref: (D, D) PyTorch (out, in)   b_ref: (1, D)
    # o_ref: (Bt, N, N)
    rows, d = x_ref.shape
    bt = rows // n
    hi = lax.Precision.HIGHEST

    # ---- Linear: x @ W^T + b as one tall (Bt*N, D) @ (D, D)^T MXU matmul.
    # Contract last dims of both operands -> no transposed copy of W.
    mapped = lax.dot_general(
        x_ref[...], w_ref[...], (((1,), (1,)), ((), ())),
        preferred_element_type=jnp.float32, precision=hi) + b_ref[...]
    mapped = mapped.reshape(bt, n, d)                 # split of full 8-sublane tiles

    # ---- Gram / adjacency: batched mapped @ mapped^T (contract D, batch Bt).
    adj = lax.dot_general(
        mapped, mapped, (((2,), (2,)), ((0,), (0,))),
        preferred_element_type=jnp.float32, precision=hi)    # (Bt, N, N)

    # ---- -1e8 on the diagonal, leaky_relu(0.01), row softmax, +I.
    row = lax.broadcasted_iota(jnp.int32, (1, n, n), 1)
    col = lax.broadcasted_iota(jnp.int32, (1, n, n), 2)
    diag = row == col                                 # (1, N, N), broadcasts over Bt

    adj = jnp.where(diag, adj - 1e8, adj)
    adj = jnp.maximum(adj, 0.01 * adj)                # leaky_relu, slope 0.01

    adj = adj - jnp.max(adj, axis=-1, keepdims=True)
    e = jnp.exp(adj)
    sm = e / jnp.sum(e, axis=-1, keepdims=True)       # exact divide (numerics parity)

    o_ref[...] = jnp.where(diag, sm + 1.0, sm).astype(o_ref.dtype)


# ---------------------------------------------------------------------------
# Wrapper
# ---------------------------------------------------------------------------
def dot_graph_construction(node_features, weight, bias,
                           *, vmem_limit_bytes=32 << 20):
    """node_features: (bs, N, D); weight: (D, D) PyTorch (out, in); bias: (D,).

    Returns the (bs, N, N) adjacency in float32.  Inputs may be f32 or bf16
    (same dtype for x / W / b); they are fed to the MXU in their native dtype
    with f32 accumulation.
    """
    bs, n, d = node_features.shape
    # Leave headroom under the explicit VMEM limit for Mosaic scratch.
    bt, bs_pad = _plan_batch_tile(bs, n, d, (vmem_limit_bytes * 5) // 8)
    grid = (bs_pad // bt,)

    x = node_features
    if bs_pad != bs:
        # Zero-pad so padded rows flow through softmax on clean data.
        x = jnp.concatenate(
            [x, jnp.zeros((bs_pad - bs, n, d), x.dtype)], axis=0)
    x2 = x.reshape(bs_pad * n, d)          # contiguous HBM slab, MXU-operand layout
    b2 = bias.reshape(1, d)

    out = pl.pallas_call(
        functools.partial(_dot_graph_kernel, n=n),
        out_shape=jax.ShapeDtypeStruct((bs_pad, n, n), jnp.float32),
        grid_spec=pltpu.PrefetchScalarGridSpec(
            num_scalar_prefetch=0,
            grid=grid,
            in_specs=[
                pl.BlockSpec((bt * n, d), lambda i: (i, 0)),
                pl.BlockSpec((d, d), lambda i: (0, 0)),
                pl.BlockSpec((1, d), lambda i: (0, 0)),
            ],
            out_specs=pl.BlockSpec((bt, n, n), lambda i: (i, 0, 0)),
        ),
        compiler_params=pltpu.CompilerParams(
            dimension_semantics=("parallel",),
            vmem_limit_bytes=vmem_limit_bytes,
        ),
    )(x2, weight, b2)

    return out[:bs]


# ---------------------------------------------------------------------------
# Pure-JAX reference (highest precision so it matches the f32 MXU path).
# ---------------------------------------------------------------------------
def _reference(node_features, weight, bias):
    hi = lax.Precision.HIGHEST
    mapped = jnp.einsum("bnd,od->bno", node_features, weight, precision=hi) + bias
    adj = jnp.einsum("bnd,bmd->bnm", mapped, mapped, precision=hi)
    n = adj.shape[1]
    eye = jnp.eye(n, dtype=adj.dtype)
    adj = adj - eye * 1e8
    adj = jnp.where(adj >= 0, adj, 0.01 * adj)
    adj = jax.nn.softmax(adj, axis=-1)
    return adj + eye


if __name__ == "__main__":
    bs, N, D = 2, 8, 32  # small shapes consistent with (batch, nodes, input_dim)

    key = jax.random.PRNGKey(0)
    kx, kw, kb = jax.random.split(key, 3)

    x = jax.random.normal(kx, (bs, N, D), dtype=jnp.float32)

    # Deterministic Linear(D, D) init, PyTorch-style uniform(-1/sqrt(D), 1/sqrt(D)).
    bound = 1.0 / (D ** 0.5)
    weight = jax.random.uniform(kw, (D, D), minval=-bound, maxval=bound,
                                dtype=jnp.float32)
    bias = jax.random.uniform(kb, (D,), minval=-bound, maxval=bound,
                              dtype=jnp.float32)

    out = jax.block_until_ready(dot_graph_construction(x, weight, bias))
    ref = jax.block_until_ready(_reference(x, weight, bias))

    assert out.shape == (bs, N, N)
    assert bool(jnp.isfinite(out).all())
    max_diff = float(jnp.max(jnp.abs(out - ref)))
    assert jnp.allclose(out, ref, atol=2e-3, rtol=2e-3), (
        f"mismatch vs reference, max abs diff = {max_diff}")

    print("KERNEL_OK")
</pallas_src>

<mosaic_0001>
module attributes {stable_mosaic.version = 11 : i64} {
  func.func @_dot_graph_kernel(%arg0: i32, %arg1: memref<16x32xf32, #tpu.memory_space<vmem>>, %arg2: memref<32x32xf32, #tpu.memory_space<vmem>>, %arg3: memref<1x32xf32, #tpu.memory_space<vmem>>, %arg4: memref<2x8x8xf32, #tpu.memory_space<vmem>>) attributes {dimension_semantics = [#tpu.dimension_semantics<parallel>], iteration_bounds = array<i64: 1>, scalar_prefetch = 0 : i64, scratch_operands = 0 : i64, tpu.core_type = #tpu.core_type<tc>, window_params = [{transform_indices = @transform_0, window_bounds = array<i64: 16, 32>}, {pipeline_mode = #tpu.pipeline_mode<synchronous>, transform_indices = @transform_1, window_bounds = array<i64: 32, 32>}, {pipeline_mode = #tpu.pipeline_mode<synchronous>, transform_indices = @transform_2, window_bounds = array<i64: 1, 32>}, {transform_indices = @transform_3, window_bounds = array<i64: 2, 8, 8>}]} {
    %c0 = arith.constant 0 : index
    %c0_0 = arith.constant 0 : index
    %0 = vector.load %arg1[%c0, %c0_0] : memref<16x32xf32, #tpu.memory_space<vmem>>, vector<16x32xf32>
    %c0_1 = arith.constant 0 : index
    %c0_2 = arith.constant 0 : index
    %1 = vector.load %arg2[%c0_1, %c0_2] : memref<32x32xf32, #tpu.memory_space<vmem>>, vector<32x32xf32>
    %cst = arith.constant dense<0.000000e+00> : vector<16x32xf32>
    %2 = tpu.matmul %0, %1, %cst {dimension_numbers = #tpu.dot_dimension_numbers<[1], [1], [0], [0], [0, 0, 1, 0], [], []>, precision = #tpu.contract_precision<fp32>} : vector<16x32xf32>, vector<32x32xf32>, vector<16x32xf32> -> vector<16x32xf32>
    %c0_3 = arith.constant 0 : index
    %c0_4 = arith.constant 0 : index
    %3 = vector.load %arg3[%c0_3, %c0_4] : memref<1x32xf32, #tpu.memory_space<vmem>>, vector<1x32xf32>
    %4 = vector.broadcast %3 : vector<1x32xf32> to vector<16x32xf32>
    %5 = arith.addf %2, %4 : vector<16x32xf32>
    %6 = vector.shape_cast %5 : vector<16x32xf32> to vector<2x8x32xf32>
    %cst_5 = arith.constant dense<0.000000e+00> : vector<2x8x8xf32>
    %7 = tpu.matmul %6, %6, %cst_5 {dimension_numbers = #tpu.dot_dimension_numbers<[2], [2], [1], [1], [0, 0, 0, 1, 1, 1], [0], [0]>, precision = #tpu.contract_precision<fp32>} : vector<2x8x32xf32>, vector<2x8x32xf32>, vector<2x8x8xf32> -> vector<2x8x8xf32>
    %8 = tpu.iota {dimensions = array<i32: 1>} : vector<1x8x8xi32>
    %9 = tpu.iota {dimensions = array<i32: 2>} : vector<1x8x8xi32>
    %10 = arith.cmpi eq, %8, %9 : vector<1x8x8xi32>
    %cst_6 = arith.constant 1.000000e+08 : f32
    %11 = vector.broadcast %cst_6 : f32 to vector<2x8x8xf32>
    %12 = arith.subf %7, %11 : vector<2x8x8xf32>
    %13 = vector.shape_cast %10 : vector<1x8x8xi1> to vector<1x8x8xi1>
    %14 = vector.broadcast %13 : vector<1x8x8xi1> to vector<2x8x8xi1>
    %15 = arith.select %14, %12, %7 : vector<2x8x8xi1>, vector<2x8x8xf32>
    %cst_7 = arith.constant 0.00999999977 : f32
    %16 = vector.broadcast %cst_7 : f32 to vector<2x8x8xf32>
    %17 = arith.mulf %16, %15 : vector<2x8x8xf32>
    %18 = arith.maximumf %15, %17 : vector<2x8x8xf32>
    %cst_8 = arith.constant dense<0xFF800000> : vector<2x8xf32>
    %19 = vector.multi_reduction <maximumf>, %18, %cst_8 [2] : vector<2x8x8xf32> to vector<2x8xf32>
    %20 = vector.shape_cast %19 : vector<2x8xf32> to vector<2x8x1xf32>
    %21 = vector.broadcast %20 : vector<2x8x1xf32> to vector<2x8x8xf32>
    %22 = arith.subf %18, %21 : vector<2x8x8xf32>
    %23 = math.exp %22 : vector<2x8x8xf32>
    %cst_9 = arith.constant dense<0.000000e+00> : vector<2x8xf32>
    %24 = vector.multi_reduction <add>, %23, %cst_9 [2] : vector<2x8x8xf32> to vector<2x8xf32>
    %25 = vector.shape_cast %24 : vector<2x8xf32> to vector<2x8x1xf32>
    %26 = vector.broadcast %25 : vector<2x8x1xf32> to vector<2x8x8xf32>
    %27 = arith.divf %23, %26 : vector<2x8x8xf32>
    %cst_10 = arith.constant 1.000000e+00 : f32
    %28 = vector.broadcast %cst_10 : f32 to vector<2x8x8xf32>
    %29 = arith.addf %27, %28 : vector<2x8x8xf32>
    %30 = vector.shape_cast %10 : vector<1x8x8xi1> to vector<1x8x8xi1>
    %31 = vector.broadcast %30 : vector<1x8x8xi1> to vector<2x8x8xi1>
    %32 = arith.select %31, %29, %27 : vector<2x8x8xi1>, vector<2x8x8xf32>
    %c0_11 = arith.constant 0 : index
    %c0_12 = arith.constant 0 : index
    %c0_13 = arith.constant 0 : index
    %33 = vector.load %arg4[%c0_11, %c0_12, %c0_13] : memref<2x8x8xf32, #tpu.memory_space<vmem>>, vector<2x8x8xf32>
    tpu.vector_store %arg4[%c0_11, %c0_12, %c0_13], %32 {strides = array<i32>} : memref<2x8x8xf32, #tpu.memory_space<vmem>>, vector<2x8x8xf32>,
    return
  }
  func.func @transform_0(%arg0: i32) -> (i32, i32) {
    %c0_i32 = arith.constant 0 : i32
    %c0_i32_0 = arith.constant 0 : i32
    return %arg0, %c0_i32 : i32, i32
  }
  func.func @transform_1(%arg0: i32) -> (i32, i32) {
    %c0_i32 = arith.constant 0 : i32
    %c0_i32_0 = arith.constant 0 : i32
    %c0_i32_1 = arith.constant 0 : i32
    return %c0_i32, %c0_i32_0 : i32, i32
  }
  func.func @transform_2(%arg0: i32) -> (i32, i32) {
    %c0_i32 = arith.constant 0 : i32
    %c0_i32_0 = arith.constant 0 : i32
    %c0_i32_1 = arith.constant 0 : i32
    return %c0_i32, %c0_i32_0 : i32, i32
  }
  func.func @transform_3(%arg0: i32) -> (i32, i32, i32) {
    %c0_i32 = arith.constant 0 : i32
    %c0_i32_0 = arith.constant 0 : i32
    %c0_i32_1 = arith.constant 0 : i32
    return %arg0, %c0_i32, %c0_i32_0 : i32, i32, i32
  }
}

</mosaic_0001>

<llo_original>
// kernel: tpu_custom_call.1
$region0: #{tpu_custom_call.1}
  #allocation0 [shape = 'u32[]', space=smem, size = 0x4, offset = 0x4, fixed_abs, tag = 'smem constant byte address 0x4 - core index']
  #allocation1 [shape = 'u32[144,128]{1,0:T(1,128)}', space=vmem, size = 0x12000, scoped, tag = 'internal scratch']
  %s0 = inlined_call_operand.hbm [shape: f32[16,32], index: 0, kind: input, shape index: {}]
  %s1 = inlined_call_operand.hbm [shape: f32[32,32], index: 1, kind: input, shape index: {}]
  %s2 = inlined_call_operand.vmem [shape: f32[1,32], index: 2, kind: input, shape index: {}]
  %s3 = inlined_call_operand.hbm [shape: f32[2,8,8], index: 3, kind: output, shape index: {}]
  %s4 = sld [smem:[#allocation0]]
  $region30: #{tpu_custom_call.1} parent=0
    _
  %s6 = ssub.s32 1, %s4
  %s7 = scalar_select 0, %s6, %s4
  $region1: #{tpu_custom_call.1} parent=0
    #allocation2 [shape = 'u8[8192]{0}', space=vmem, size = 0x2000, scoped, tag = 'input window, operand 0, single buffered']
    #allocation3 [shape = 's32[1]{0}', space=sflag, size = 0x4, scoped, tag = 'scoped memory for tpu_custom_call.1']
    #allocation4 [shape = 's32[1]{0}', space=sflag, size = 0x4, scoped, tag = 'scoped memory for tpu_custom_call.1']
    #allocation5 [shape = 'u8[16384]{0}', space=vmem, size = 0x4000, scoped, tag = 'input window, operand 1, single buffered']
    #allocation6 [shape = 's32[1]{0}', space=sflag, size = 0x4, scoped, tag = 'scoped memory for tpu_custom_call.1']
    #allocation7 [shape = 'u8[8192]{0}', space=vmem, size = 0x2000, scoped, tag = 'output window, operand 0, single buffered']
    %8 = vsyncpa [#allocation3], 0
    %9 = vsyncpa [#allocation6], 0
    %10 = vsyncpa [#allocation4], 0
    // Predicated region
    $region2: #{tpu_custom_call.1} parent=1 // pred_check
      _
    $region3: #{tpu_custom_call.1} parent=1 // pred_check_branch
      %12 = sbr.rel (0) target = $region5
    $region4: #{tpu_custom_call.1} parent=1 // pred_region
      %s14 = ssub.s32 256, 256
      %15 = vsyncadd [#allocation3], %s14
      %s16 = sshll.u32 [#allocation2], 4
      %s17 = int_to_ptr.vmem [resolvable:$true] %s16
      %22 = dma.hbm_to_vmem [thread:$0]  %s0, 256, %s17, [#allocation3], 128, 128, 8
    $region5: #{tpu_custom_call.1} parent=1 // pred_fallthru
      _
    // Predicated region
    $region6: #{tpu_custom_call.1} parent=1 // pred_check
      _
    $region7: #{tpu_custom_call.1} parent=1 // pred_check_branch
      %24 = sbr.rel (0) target = $region9
    $region8: #{tpu_custom_call.1} parent=1 // pred_region
      %s26 = ssub.s32 512, 512
      %27 = vsyncadd [#allocation6], %s26
      %s28 = sshll.u32 [#allocation5], 4
      %s29 = int_to_ptr.vmem [resolvable:$true] %s28
      %34 = dma.hbm_to_vmem [thread:$0]  %s1, 512, %s29, [#allocation6], 128, 128, 8
    $region9: #{tpu_custom_call.1} parent=1 // pred_fallthru
      _
    // Predicated region
    $region10: #{tpu_custom_call.1} parent=1 // pred_check
      _
    $region11: #{tpu_custom_call.1} parent=1 // pred_check_branch
      %36 = sbr.rel (0) target = $region13
    $region12: #{tpu_custom_call.1} parent=1 // pred_region
      _
    $region13: #{tpu_custom_call.1} parent=1 // pred_fallthru
      _
    // Predicated region
    $region14: #{tpu_custom_call.1} parent=1 // pred_check
      _
    $region15: #{tpu_custom_call.1} parent=1 // pred_check_branch
      %38 = sbr.rel (0) target = $region17
    $region16: #{tpu_custom_call.1} parent=1 // pred_region
      %39 = dma.done [#allocation3], 256
    $region17: #{tpu_custom_call.1} parent=1 // pred_fallthru
      _
    // Predicated region
    $region18: #{tpu_custom_call.1} parent=1 // pred_check
      _
    $region19: #{tpu_custom_call.1} parent=1 // pred_check_branch
      %41 = sbr.rel (0) target = $region21
    $region20: #{tpu_custom_call.1} parent=1 // pred_region
      %42 = dma.done [#allocation6], 512
    $region21: #{tpu_custom_call.1} parent=1 // pred_fallthru
      _
    %v43 = vld [vmem:[#allocation2] sm:$0xff]
    %v44 = vld [vmem:[#allocation2 + $0x8] sm:$0xff]
    %v45 = vld [vmem:[#allocation5] sm:$0xff]
    %v46 = vld [vmem:[#allocation5 + $0x8] sm:$0xff]
    %v47 = vld [vmem:[#allocation5 + $0x10] sm:$0xff]
    %v48 = vld [vmem:[#allocation5 + $0x18] sm:$0xff]
    %v49 = vld [vmem:[%s2] sm:$0x1]
    %v51 = vlaneseq
    %v52 = vshrl.u32 %v51, 7
    %v53 = vsub.s32 0, %v52
    %v54 = vrot.slane %v49, %v53
    %vm56 = vcmask 261120
    %v58 = vsel %vm56, %v43, 0
    %v61 = vsel %vm56, %v44, 0
    %v64 = vsel %vm56, %v45, 0
    %v67 = vsel %vm56, %v46, 0
    %v70 = vsel %vm56, %v47, 0
    %v73 = vsel %vm56, %v48, 0
    %75 = vmatprep.subr.mxu0 0.0
    %v76 = vand.u32 %v64, 4294901760
    %77 = vmatpush1.xpose.msra.mxu0 %v76
    %78 = vmatprep.subr.mxu0 0.0
    %v79 = vand.u32 %v67, 4294901760
    %80 = vmatpush1.xpose.msra.mxu0 %v79
    %81 = vmatprep.subr.mxu0 0.0
    %v82 = vand.u32 %v70, 4294901760
    %83 = vmatpush1.xpose.msra.mxu0 %v82
    %84 = vmatprep.subr.mxu0 0.0
    %v85 = vand.u32 %v73, 4294901760
    %86 = vmatpush1.xpose.msra.mxu0 %v85
    %87 = vmatprep.subr.mxu0 0.0
    %88 = vmatpush1.xpose.msra.mxu0 0.0
    %89 = vmatprep.subr.mxu0 0.0
    %90 = vmatpush1.xpose.msra.mxu0 0.0
    %91 = vmatprep.subr.mxu0 0.0
    %92 = vmatpush1.xpose.msra.mxu0 0.0
    %93 = vmatprep.subr.mxu0 0.0
    %94 = vmatpush1.xpose.msra.mxu0 0.0
    %95 = vmatprep.subr.mxu0 0.0
    %96 = vmatpush1.xpose.msra.mxu0 0.0
    %97 = vmatprep.subr.mxu0 0.0
    %98 = vmatpush1.xpose.msra.mxu0 0.0
    %99 = vmatprep.subr.mxu0 0.0
    %100 = vmatpush1.xpose.msra.mxu0 0.0
    %101 = vmatprep.subr.mxu0 0.0
    %102 = vmatpush1.xpose.msra.mxu0 0.0
    %103 = vmatprep.subr.mxu0 0.0
    %104 = vmatpush1.xpose.msra.mxu0 0.0
    %105 = vmatprep.subr.mxu0 0.0
    %106 = vmatpush1.xpose.msra.mxu0 0.0
    %107 = vmatprep.subr.mxu0 0.0
    %108 = vmatpush1.xpose.msra.mxu0 0.0
    %109 = vmatprep.subr.mxu0 0.0
    %110 = vmatpush1.xpose.msra.mxu0 0.0
    %111 = vmatprep.subr.mxu0 0.0
    %112 = vmatpush1.xpose.msra.mxu0 0.0
    %113 = vmatprep.subr.mxu0 0.0
    %114 = vmatpush1.xpose.msra.mxu0 0.0
    %115 = vmatprep.subr.mxu0 0.0
    %116 = vmatpush1.xpose.msra.mxu0 0.0
    %117 = vmatprep.subr.mxu0 0.0
    %118 = vmatpush1.xpose.msra.mxu0 0.0
    %119 = vmatprep.subr.mxu0 0.0
    %120 = vmatpush1.xpose.msra.mxu0 0.0
    %121 = vmatprep.subr.mxu0 0.0
    %122 = vmatpush1.xpose.msra.mxu0 0.0
    %123 = vmatprep.subr.mxu0 0.0
    %124 = vmatpush1.xpose.msra.mxu0 0.0
    %125 = vmatprep.subr.mxu0 0.0
    %126 = vmatpush1.xpose.msra.mxu0 0.0
    %127 = vmatprep.subr.mxu0 0.0
    %128 = vmatpush1.xpose.msra.mxu0 0.0
    %129 = vmatprep.subr.mxu0 0.0
    %130 = vmatpush1.xpose.msra.mxu0 0.0
    %131 = vmatprep.subr.mxu0 0.0
    %132 = vmatpush1.xpose.msra.mxu0 0.0
    %133 = vmatprep.subr.mxu0 0.0
    %134 = vmatpush1.xpose.msra.mxu0 0.0
    %135 = vmatprep.subr.mxu0 0.0
    %136 = vmatpush1.xpose.msra.mxu0 0.0
    %137 = vmatprep.subr.mxu0 0.0
    %138 = vmatpush1.xpose.msra.mxu0 0.0
    %139 = vmatprep.subr.mxu0 0.0
    %140 = vmatpush1.xpose.msra.mxu0 0.0
    %141 = vmatprep.subr.mxu0 0.0
    %142 = vmatpush1.xpose.msra.mxu0 0.0
    %143 = vmatprep.mubr.f32.mxu0 0.0
    %v144 = vand.u32 %v58, 4294901760
    %v145 = vsub.f32 %v58, %v144
    %v146 = vand.u32 %v145, 4294901760
    %v147 = vsub.f32 %v145, %v146
    %v148 = vand.u32 %v147, 4294901760
    %149 = vmatmul.mubr.f32.gmra.mrb[0].mxu0 %v148
    %v150 = vpop.f32.mrb[0].mxu0
    %v151 = vadd.f32 %v54, %v150
    %v152 = vpop.f32.mrb[0].mxu0
    %153 = vmatprep.mubr.f32.mxu0 0.0
    %v154 = vand.u32 %v61, 4294901760
    %v155 = vsub.f32 %v61, %v154
    %v156 = vand.u32 %v155, 4294901760
    %v157 = vsub.f32 %v155, %v156
    %v158 = vand.u32 %v157, 4294901760
    %159 = vmatmul.mubr.f32.gmra.mrb[0].mxu0 %v158
    %v160 = vpop.f32.mrb[0].mxu0
    %v161 = vadd.f32 %v54, %v160
    %v162 = vpop.f32.mrb[0].mxu0
    %163 = vdwg.mxu0
    %164 = vmatprep.subr.mxu0 0.0
    %v165 = vand.u32 %v64, 4294901760
    %v166 = vsub.f32 %v64, %v165
    %v167 = vand.u32 %v166, 4294901760
    %v168 = vsub.f32 %v166, %v167
    %v169 = vand.u32 %v168, 4294901760
    %170 = vmatpush1.xpose.msra.mxu0 %v169
    %171 = vmatprep.subr.mxu0 0.0
    %v172 = vand.u32 %v67, 4294901760
    %v173 = vsub.f32 %v67, %v172
    %v174 = vand.u32 %v173, 4294901760
    %v175 = vsub.f32 %v173, %v174
    %v176 = vand.u32 %v175, 4294901760
    %177 = vmatpush1.xpose.msra.mxu0 %v176
    %178 = vmatprep.subr.mxu0 0.0
    %v179 = vand.u32 %v70, 4294901760
    %v180 = vsub.f32 %v70, %v179
    %v181 = vand.u32 %v180, 4294901760
    %v182 = vsub.f32 %v180, %v181
    %v183 = vand.u32 %v182, 4294901760
    %184 = vmatpush1.xpose.msra.mxu0 %v183
    %185 = vmatprep.subr.mxu0 0.0
    %v186 = vand.u32 %v73, 4294901760
    %v187 = vsub.f32 %v73, %v186
    %v188 = vand.u32 %v187, 4294901760
    %v189 = vsub.f32 %v187, %v188
    %v190 = vand.u32 %v189, 4294901760
    %191 = vmatpush1.xpose.msra.mxu0 %v190
    %192 = vmatprep.subr.mxu0 0.0
    %193 = vmatpush1.xpose.msra.mxu0 0.0
    %194 = vmatprep.subr.mxu0 0.0
    %195 = vmatpush1.xpose.msra.mxu0 0.0
    %196 = vmatprep.subr.mxu0 0.0
    %197 = vmatpush1.xpose.msra.mxu0 0.0
    %198 = vmatprep.subr.mxu0 0.0
    %199 = vmatpush1.xpose.msra.mxu0 0.0
    %200 = vmatprep.subr.mxu0 0.0
    %201 = vmatpush1.xpose.msra.mxu0 0.0
    %202 = vmatprep.subr.mxu0 0.0
    %203 = vmatpush1.xpose.msra.mxu0 0.0
    %204 = vmatprep.subr.mxu0 0.0
    %205 = vmatpush1.xpose.msra.mxu0 0.0
    %206 = vmatprep.subr.mxu0 0.0
    %207 = vmatpush1.xpose.msra.mxu0 0.0
    %208 = vmatprep.subr.mxu0 0.0
    %209 = vmatpush1.xpose.msra.mxu0 0.0
    %210 = vmatprep.subr.mxu0 0.0
    %211 = vmatpush1.xpose.msra.mxu0 0.0
    %212 = vmatprep.subr.mxu0 0.0
    %213 = vmatpush1.xpose.msra.mxu0 0.0
    %214 = vmatprep.subr.mxu0 0.0
    %215 = vmatpush1.xpose.msra.mxu0 0.0
    %216 = vmatprep.subr.mxu0 0.0
    %217 = vmatpush1.xpose.msra.mxu0 0.0
    %218 = vmatprep.subr.mxu0 0.0
    %219 = vmatpush1.xpose.msra.mxu0 0.0
    %220 = vmatprep.subr.mxu0 0.0
    %221 = vmatpush1.xpose.msra.mxu0 0.0
    %222 = vmatprep.subr.mxu0 0.0
    %223 = vmatpush1.xpose.msra.mxu0 0.0
    %224 = vmatprep.subr.mxu0 0.0
    %225 = vmatpush1.xpose.msra.mxu0 0.0
    %226 = vmatprep.subr.mxu0 0.0
    %227 = vmatpush1.xpose.msra.mxu0 0.0
    %228 = vmatprep.subr.mxu0 0.0
    %229 = vmatpush1.xpose.msra.mxu0 0.0
    %230 = vmatprep.subr.mxu0 0.0
    %231 = vmatpush1.xpose.msra.mxu0 0.0
    %232 = vmatprep.subr.mxu0 0.0
    %233 = vmatpush1.xpose.msra.mxu0 0.0
    %234 = vmatprep.subr.mxu0 0.0
    %235 = vmatpush1.xpose.msra.mxu0 0.0
    %236 = vmatprep.subr.mxu0 0.0
    %237 = vmatpush1.xpose.msra.mxu0 0.0
    %238 = vmatprep.subr.mxu0 0.0
    %239 = vmatpush1.xpose.msra.mxu0 0.0
    %240 = vmatprep.subr.mxu0 0.0
    %241 = vmatpush1.xpose.msra.mxu0 0.0
    %242 = vmatprep.subr.mxu0 0.0
    %243 = vmatpush1.xpose.msra.mxu0 0.0
    %244 = vmatprep.subr.mxu0 0.0
    %245 = vmatpush1.xpose.msra.mxu0 0.0
    %246 = vmatprep.subr.mxu0 0.0
    %247 = vmatpush1.xpose.msra.mxu0 0.0
    %248 = vmatprep.mubr.f32.mxu0 0.0
    %v249 = vand.u32 %v58, 4294901760
    %250 = vmatmul.mubr.f32.gmra.mrb[0].mxu0 %v249
    %v251 = vpop.f32.mrb[0].mxu0
    %v252 = vadd.f32 %v151, %v251
    %v253 = vpop.f32.mrb[0].mxu0
    %254 = vmatprep.mubr.f32.mxu0 0.0
    %v255 = vand.u32 %v61, 4294901760
    %256 = vmatmul.mubr.f32.gmra.mrb[0].mxu0 %v255
    %v257 = vpop.f32.mrb[0].mxu0
    %v258 = vadd.f32 %v161, %v257
    %v259 = vpop.f32.mrb[0].mxu0
    %260 = vdwg.mxu0
    %261 = vmatprep.subr.mxu0 0.0
    %v262 = vand.u32 %v64, 4294901760
    %v263 = vsub.f32 %v64, %v262
    %264 = vmatpush1.xpose.msra.mxu0 %v263
    %265 = vmatprep.subr.mxu0 0.0
    %v266 = vand.u32 %v67, 4294901760
    %v267 = vsub.f32 %v67, %v266
    %268 = vmatpush1.xpose.msra.mxu0 %v267
    %269 = vmatprep.subr.mxu0 0.0
    %v270 = vand.u32 %v70, 4294901760
    %v271 = vsub.f32 %v70, %v270
    %272 = vmatpush1.xpose.msra.mxu0 %v271
    %273 = vmatprep.subr.mxu0 0.0
    %v274 = vand.u32 %v73, 4294901760
    %v275 = vsub.f32 %v73, %v274
    %276 = vmatpush1.xpose.msra.mxu0 %v275
    %277 = vmatprep.subr.mxu0 0.0
    %278 = vmatpush1.xpose.msra.mxu0 0.0
    %279 = vmatprep.subr.mxu0 0.0
    %280 = vmatpush1.xpose.msra.mxu0 0.0
    %281 = vmatprep.subr.mxu0 0.0
    %282 = vmatpush1.xpose.msra.mxu0 0.0
    %283 = vmatprep.subr.mxu0 0.0
    %284 = vmatpush1.xpose.msra.mxu0 0.0
    %285 = vmatprep.subr.mxu0 0.0
    %286 = vmatpush1.xpose.msra.mxu0 0.0
    %287 = vmatprep.subr.mxu0 0.0
    %288 = vmatpush1.xpose.msra.mxu0 0.0
    %289 = vmatprep.subr.mxu0 0.0
    %290 = vmatpush1.xpose.msra.mxu0 0.0
    %291 = vmatprep.subr.mxu0 0.0
    %292 = vmatpush1.xpose.msra.mxu0 0.0
    %293 = vmatprep.subr.mxu0 0.0
    %294 = vmatpush1.xpose.msra.mxu0 0.0
    %295 = vmatprep.subr.mxu0 0.0
    %296 = vmatpush1.xpose.msra.mxu0 0.0
    %297 = vmatprep.subr.mxu0 0.0
    %298 = vmatpush1.xpose.msra.mxu0 0.0
    %299 = vmatprep.subr.mxu0 0.0
    %300 = vmatpush1.xpose.msra.mxu0 0.0
    %301 = vmatprep.subr.mxu0 0.0
    %302 = vmatpush1.xpose.msra.mxu0 0.0
    %303 = vmatprep.subr.mxu0 0.0
    %304 = vmatpush1.xpose.msra.mxu0 0.0
    %305 = vmatprep.subr.mxu0 0.0
    %306 = vmatpush1.xpose.msra.mxu0 0.0
    %307 = vmatprep.subr.mxu0 0.0
    %308 = vmatpush1.xpose.msra.mxu0 0.0
    %309 = vmatprep.subr.mxu0 0.0
    %310 = vmatpush1.xpose.msra.mxu0 0.0
    %311 = vmatprep.subr.mxu0 0.0
    %312 = vmatpush1.xpose.msra.mxu0 0.0
    %313 = vmatprep.subr.mxu0 0.0
    %314 = vmatpush1.xpose.msra.mxu0 0.0
    %315 = vmatprep.subr.mxu0 0.0
    %316 = vmatpush1.xpose.msra.mxu0 0.0
    %317 = vmatprep.subr.mxu0 0.0
    %318 = vmatpush1.xpose.msra.mxu0 0.0
    %319 = vmatprep.subr.mxu0 0.0
    %320 = vmatpush1.xpose.msra.mxu0 0.0
    %321 = vmatprep.subr.mxu0 0.0
    %322 = vmatpush1.xpose.msra.mxu0 0.0
    %323 = vmatprep.subr.mxu0 0.0
    %324 = vmatpush1.xpose.msra.mxu0 0.0
    %325 = vmatprep.subr.mxu0 0.0
    %326 = vmatpush1.xpose.msra.mxu0 0.0
    %327 = vmatprep.subr.mxu0 0.0
    %328 = vmatpush1.xpose.msra.mxu0 0.0
    %329 = vmatprep.subr.mxu0 0.0
    %330 = vmatpush1.xpose.msra.mxu0 0.0
    %331 = vmatprep.subr.mxu0 0.0
    %332 = vmatpush1.xpose.msra.mxu0 0.0
    %333 = vmatprep.mubr.f32.mxu0 0.0
    %v334 = vand.u32 %v58, 4294901760
    %v335 = vsub.f32 %v58, %v334
    %336 = vmatmul.mubr.f32.gmra.mrb[0].mxu0 %v335
    %v337 = vpop.f32.mrb[0].mxu0
    %v338 = vadd.f32 %v252, %v337
    %v339 = vpop.f32.mrb[0].mxu0
    %340 = vmatprep.mubr.f32.mxu0 0.0
    %v341 = vand.u32 %v61, 4294901760
    %v342 = vsub.f32 %v61, %v341
    %343 = vmatmul.mubr.f32.gmra.mrb[0].mxu0 %v342
    %v344 = vpop.f32.mrb[0].mxu0
    %v345 = vadd.f32 %v258, %v344
    %v346 = vpop.f32.mrb[0].mxu0
    %347 = vdwg.mxu0
    %348 = vmatprep.subr.mxu0 0.0
    %v349 = vand.u32 %v64, 4294901760
    %350 = vmatpush1.xpose.msra.mxu0 %v349
    %351 = vmatprep.subr.mxu0 0.0
    %v352 = vand.u32 %v67, 4294901760
    %353 = vmatpush1.xpose.msra.mxu0 %v352
    %354 = vmatprep.subr.mxu0 0.0
    %v355 = vand.u32 %v70, 4294901760
    %356 = vmatpush1.xpose.msra.mxu0 %v355
    %357 = vmatprep.subr.mxu0 0.0
    %v358 = vand.u32 %v73, 4294901760
    %359 = vmatpush1.xpose.msra.mxu0 %v358
    %360 = vmatprep.subr.mxu0 0.0
    %361 = vmatpush1.xpose.msra.mxu0 0.0
    %362 = vmatprep.subr.mxu0 0.0
    %363 = vmatpush1.xpose.msra.mxu0 0.0
    %364 = vmatprep.subr.mxu0 0.0
    %365 = vmatpush1.xpose.msra.mxu0 0.0
    %366 = vmatprep.subr.mxu0 0.0
    %367 = vmatpush1.xpose.msra.mxu0 0.0
    %368 = vmatprep.subr.mxu0 0.0
    %369 = vmatpush1.xpose.msra.mxu0 0.0
    %370 = vmatprep.subr.mxu0 0.0
    %371 = vmatpush1.xpose.msra.mxu0 0.0
    %372 = vmatprep.subr.mxu0 0.0
    %373 = vmatpush1.xpose.msra.mxu0 0.0
    %374 = vmatprep.subr.mxu0 0.0
    %375 = vmatpush1.xpose.msra.mxu0 0.0
    %376 = vmatprep.subr.mxu0 0.0
    %377 = vmatpush1.xpose.msra.mxu0 0.0
    %378 = vmatprep.subr.mxu0 0.0
    %379 = vmatpush1.xpose.msra.mxu0 0.0
    %380 = vmatprep.subr.mxu0 0.0
    %381 = vmatpush1.xpose.msra.mxu0 0.0
    %382 = vmatprep.subr.mxu0 0.0
    %383 = vmatpush1.xpose.msra.mxu0 0.0
    %384 = vmatprep.subr.mxu0 0.0
    %385 = vmatpush1.xpose.msra.mxu0 0.0
    %386 = vmatprep.subr.mxu0 0.0
    %387 = vmatpush1.xpose.msra.mxu0 0.0
    %388 = vmatprep.subr.mxu0 0.0
    %389 = vmatpush1.xpose.msra.mxu0 0.0
    %390 = vmatprep.subr.mxu0 0.0
    %391 = vmatpush1.xpose.msra.mxu0 0.0
    %392 = vmatprep.subr.mxu0 0.0
    %393 = vmatpush1.xpose.msra.mxu0 0.0
    %394 = vmatprep.subr.mxu0 0.0
    %395 = vmatpush1.xpose.msra.mxu0 0.0
    %396 = vmatprep.subr.mxu0 0.0
    %397 = vmatpush1.xpose.msra.mxu0 0.0
    %398 = vmatprep.subr.mxu0 0.0
    %399 = vmatpush1.xpose.msra.mxu0 0.0
    %400 = vmatprep.subr.mxu0 0.0
    %401 = vmatpush1.xpose.msra.mxu0 0.0
    %402 = vmatprep.subr.mxu0 0.0
    %403 = vmatpush1.xpose.msra.mxu0 0.0
    %404 = vmatprep.subr.mxu0 0.0
    %405 = vmatpush1.xpose.msra.mxu0 0.0
    %406 = vmatprep.subr.mxu0 0.0
    %407 = vmatpush1.xpose.msra.mxu0 0.0
    %408 = vmatprep.subr.mxu0 0.0
    %409 = vmatpush1.xpose.msra.mxu0 0.0
    %410 = vmatprep.subr.mxu0 0.0
    %411 = vmatpush1.xpose.msra.mxu0 0.0
    %412 = vmatprep.subr.mxu0 0.0
    %413 = vmatpush1.xpose.msra.mxu0 0.0
    %414 = vmatprep.subr.mxu0 0.0
    %415 = vmatpush1.xpose.msra.mxu0 0.0
    %416 = vmatprep.mubr.f32.mxu0 0.0
    %v417 = vand.u32 %v58, 4294901760
    %v418 = vsub.f32 %v58, %v417
    %v419 = vand.u32 %v418, 4294901760
    %420 = vmatmul.mubr.f32.gmra.mrb[0].mxu0 %v419
    %v421 = vpop.f32.mrb[0].mxu0
    %v422 = vadd.f32 %v338, %v421
    %v423 = vpop.f32.mrb[0].mxu0
    %424 = vmatprep.mubr.f32.mxu0 0.0
    %v425 = vand.u32 %v61, 4294901760
    %v426 = vsub.f32 %v61, %v425
    %v427 = vand.u32 %v426, 4294901760
    %428 = vmatmul.mubr.f32.gmra.mrb[0].mxu0 %v427
    %v429 = vpop.f32.mrb[0].mxu0
    %v430 = vadd.f32 %v345, %v429
    %v431 = vpop.f32.mrb[0].mxu0
    %432 = vdwg.mxu0
    %433 = vmatprep.subr.mxu0 0.0
    %v434 = vand.u32 %v64, 4294901760
    %v435 = vsub.f32 %v64, %v434
    %v436 = vand.u32 %v435, 4294901760
    %437 = vmatpush1.xpose.msra.mxu0 %v436
    %438 = vmatprep.subr.mxu0 0.0
    %v439 = vand.u32 %v67, 4294901760
    %v440 = vsub.f32 %v67, %v439
    %v441 = vand.u32 %v440, 4294901760
    %442 = vmatpush1.xpose.msra.mxu0 %v441
    %443 = vmatprep.subr.mxu0 0.0
    %v444 = vand.u32 %v70, 4294901760
    %v445 = vsub.f32 %v70, %v444
    %v446 = vand.u32 %v445, 4294901760
    %447 = vmatpush1.xpose.msra.mxu0 %v446
    %448 = vmatprep.subr.mxu0 0.0
    %v449 = vand.u32 %v73, 4294901760
    %v450 = vsub.f32 %v73, %v449
    %v451 = vand.u32 %v450, 4294901760
    %452 = vmatpush1.xpose.msra.mxu0 %v451
    %453 = vmatprep.subr.mxu0 0.0
    %454 = vmatpush1.xpose.msra.mxu0 0.0
    %455 = vmatprep.subr.mxu0 0.0
    %456 = vmatpush1.xpose.msra.mxu0 0.0
    %457 = vmatprep.subr.mxu0 0.0
    %458 = vmatpush1.xpose.msra.mxu0 0.0
    %459 = vmatprep.subr.mxu0 0.0
    %460 = vmatpush1.xpose.msra.mxu0 0.0
    %461 = vmatprep.subr.mxu0 0.0
    %462 = vmatpush1.xpose.msra.mxu0 0.0
    %463 = vmatprep.subr.mxu0 0.0
    %464 = vmatpush1.xpose.msra.mxu0 0.0
    %465 = vmatprep.subr.mxu0 0.0
    %466 = vmatpush1.xpose.msra.mxu0 0.0
    %467 = vmatprep.subr.mxu0 0.0
    %468 = vmatpush1.xpose.msra.mxu0 0.0
    %469 = vmatprep.subr.mxu0 0.0
    %470 = vmatpush1.xpose.msra.mxu0 0.0
    %471 = vmatprep.subr.mxu0 0.0
    %472 = vmatpush1.xpose.msra.mxu0 0.0
    %473 = vmatprep.subr.mxu0 0.0
    %474 = vmatpush1.xpose.msra.mxu0 0.0
    %475 = vmatprep.subr.mxu0 0.0
    %476 = vmatpush1.xpose.msra.mxu0 0.0
    %477 = vmatprep.subr.mxu0 0.0
    %478 = vmatpush1.xpose.msra.mxu0 0.0
    %479 = vmatprep.subr.mxu0 0.0
    %480 = vmatpush1.xpose.msra.mxu0 0.0
    %481 = vmatprep.subr.mxu0 0.0
    %482 = vmatpush1.xpose.msra.mxu0 0.0
    %483 = vmatprep.subr.mxu0 0.0
    %484 = vmatpush1.xpose.msra.mxu0 0.0
    %485 = vmatprep.subr.mxu0 0.0
    %486 = vmatpush1.xpose.msra.mxu0 0.0
    %487 = vmatprep.subr.mxu0 0.0
    %488 = vmatpush1.xpose.msra.mxu0 0.0
    %489 = vmatprep.subr.mxu0 0.0
    %490 = vmatpush1.xpose.msra.mxu0 0.0
    %491 = vmatprep.subr.mxu0 0.0
    %492 = vmatpush1.xpose.msra.mxu0 0.0
    %493 = vmatprep.subr.mxu0 0.0
    %494 = vmatpush1.xpose.msra.mxu0 0.0
    %495 = vmatprep.subr.mxu0 0.0
    %496 = vmatpush1.xpose.msra.mxu0 0.0
    %497 = vmatprep.subr.mxu0 0.0
    %498 = vmatpush1.xpose.msra.mxu0 0.0
    %499 = vmatprep.subr.mxu0 0.0
    %500 = vmatpush1.xpose.msra.mxu0 0.0
    %501 = vmatprep.subr.mxu0 0.0
    %502 = vmatpush1.xpose.msra.mxu0 0.0
    %503 = vmatprep.subr.mxu0 0.0
    %504 = vmatpush1.xpose.msra.mxu0 0.0
    %505 = vmatprep.subr.mxu0 0.0
    %506 = vmatpush1.xpose.msra.mxu0 0.0
    %507 = vmatprep.subr.mxu0 0.0
    %508 = vmatpush1.xpose.msra.mxu0 0.0
    %509 = vmatprep.mubr.f32.mxu0 0.0
    %v510 = vand.u32 %v58, 4294901760
    %511 = vmatmul.mubr.f32.gmra.mrb[0].mxu0 %v510
    %v512 = vpop.f32.mrb[0].mxu0
    %v513 = vadd.f32 %v422, %v512
    %v514 = vpop.f32.mrb[0].mxu0
    %515 = vmatprep.mubr.f32.mxu0 0.0
    %v516 = vand.u32 %v61, 4294901760
    %517 = vmatmul.mubr.f32.gmra.mrb[0].mxu0 %v516
    %v518 = vpop.f32.mrb[0].mxu0
    %v519 = vadd.f32 %v430, %v518
    %v520 = vpop.f32.mrb[0].mxu0
    %521 = vdwg.mxu0
    %522 = vmatprep.subr.mxu0 0.0
    %v523 = vand.u32 %v64, 4294901760
    %524 = vmatpush1.xpose.msra.mxu0 %v523
    %525 = vmatprep.subr.mxu0 0.0
    %v526 = vand.u32 %v67, 4294901760
    %527 = vmatpush1.xpose.msra.mxu0 %v526
    %528 = vmatprep.subr.mxu0 0.0
    %v529 = vand.u32 %v70, 4294901760
    %530 = vmatpush1.xpose.msra.mxu0 %v529
    %531 = vmatprep.subr.mxu0 0.0
    %v532 = vand.u32 %v73, 4294901760
    %533 = vmatpush1.xpose.msra.mxu0 %v532
    %534 = vmatprep.subr.mxu0 0.0
    %535 = vmatpush1.xpose.msra.mxu0 0.0
    %536 = vmatprep.subr.mxu0 0.0
    %537 = vmatpush1.xpose.msra.mxu0 0.0
    %538 = vmatprep.subr.mxu0 0.0
    %539 = vmatpush1.xpose.msra.mxu0 0.0
    %540 = vmatprep.subr.mxu0 0.0
    %541 = vmatpush1.xpose.msra.mxu0 0.0
    %542 = vmatprep.subr.mxu0 0.0
    %543 = vmatpush1.xpose.msra.mxu0 0.0
    %544 = vmatprep.subr.mxu0 0.0
    %545 = vmatpush1.xpose.msra.mxu0 0.0
    %546 = vmatprep.subr.mxu0 0.0
    %547 = vmatpush1.xpose.msra.mxu0 0.0
    %548 = vmatprep.subr.mxu0 0.0
    %549 = vmatpush1.xpose.msra.mxu0 0.0
    %550 = vmatprep.subr.mxu0 0.0
    %551 = vmatpush1.xpose.msra.mxu0 0.0
    %552 = vmatprep.subr.mxu0 0.0
    %553 = vmatpush1.xpose.msra.mxu0 0.0
    %554 = vmatprep.subr.mxu0 0.0
    %555 = vmatpush1.xpose.msra.mxu0 0.0
    %556 = vmatprep.subr.mxu0 0.0
    %557 = vmatpush1.xpose.msra.mxu0 0.0
    %558 = vmatprep.subr.mxu0 0.0
    %559 = vmatpush1.xpose.msra.mxu0 0.0
    %560 = vmatprep.subr.mxu0 0.0
    %561 = vmatpush1.xpose.msra.mxu0 0.0
    %562 = vmatprep.subr.mxu0 0.0
    %563 = vmatpush1.xpose.msra.mxu0 0.0
    %564 = vmatprep.subr.mxu0 0.0
    %565 = vmatpush1.xpose.msra.mxu0 0.0
    %566 = vmatprep.subr.mxu0 0.0
    %567 = vmatpush1.xpose.msra.mxu0 0.0
    %568 = vmatprep.subr.mxu0 0.0
    %569 = vmatpush1.xpose.msra.mxu0 0.0
    %570 = vmatprep.subr.mxu0 0.0
    %571 = vmatpush1.xpose.msra.mxu0 0.0
    %572 = vmatprep.subr.mxu0 0.0
    %573 = vmatpush1.xpose.msra.mxu0 0.0
    %574 = vmatprep.subr.mxu0 0.0
    %575 = vmatpush1.xpose.msra.mxu0 0.0
    %576 = vmatprep.subr.mxu0 0.0
    %577 = vmatpush1.xpose.msra.mxu0 0.0
    %578 = vmatprep.subr.mxu0 0.0
    %579 = vmatpush1.xpose.msra.mxu0 0.0
    %580 = vmatprep.subr.mxu0 0.0
    %581 = vmatpush1.xpose.msra.mxu0 0.0
    %582 = vmatprep.subr.mxu0 0.0
    %583 = vmatpush1.xpose.msra.mxu0 0.0
    %584 = vmatprep.subr.mxu0 0.0
    %585 = vmatpush1.xpose.msra.mxu0 0.0
    %586 = vmatprep.subr.mxu0 0.0
    %587 = vmatpush1.xpose.msra.mxu0 0.0
    %588 = vmatprep.subr.mxu0 0.0
    %589 = vmatpush1.xpose.msra.mxu0 0.0
    %590 = vmatprep.mubr.f32.mxu0 0.0
    %v591 = vand.u32 %v58, 4294901760
    %592 = vmatmul.mubr.f32.gmra.mrb[0].mxu0 %v591
    %v593 = vpop.f32.mrb[0].mxu0
    %v594 = vadd.f32 %v513, %v593
    %v595 = vpop.f32.mrb[0].mxu0
    %596 = vmatprep.mubr.f32.mxu0 0.0
    %v597 = vand.u32 %v61, 4294901760
    %598 = vmatmul.mubr.f32.gmra.mrb[0].mxu0 %v597
    %v599 = vpop.f32.mrb[0].mxu0
    %v600 = vadd.f32 %v519, %v599
    %v601 = vpop.f32.mrb[0].mxu0
    %602 = vdwg.mxu0
    %v604 = vsel %vm56, %v594, 0
    %606 = vmatprep.subr.mxu0 0.0
    %v607 = vand.u32 %v604, 4294901760
    %608 = vmatpush1.xpose.msra.mxu0 %v607
    %609 = vmatprep.subr.mxu0 0.0
    %610 = vmatpush1.xpose.msra.mxu0 0.0
    %611 = vmatprep.subr.mxu0 0.0
    %612 = vmatpush1.xpose.msra.mxu0 0.0
    %613 = vmatprep.subr.mxu0 0.0
    %614 = vmatpush1.xpose.msra.mxu0 0.0
    %615 = vmatprep.subr.mxu0 0.0
    %616 = vmatpush1.xpose.msra.mxu0 0.0
    %617 = vmatprep.subr.mxu0 0.0
    %618 = vmatpush1.xpose.msra.mxu0 0.0
    %619 = vmatprep.subr.mxu0 0.0
    %620 = vmatpush1.xpose.msra.mxu0 0.0
    %621 = vmatprep.subr.mxu0 0.0
    %622 = vmatpush1.xpose.msra.mxu0 0.0
    %623 = vmatprep.subr.mxu0 0.0
    %624 = vmatpush1.xpose.msra.mxu0 0.0
    %625 = vmatprep.subr.mxu0 0.0
    %626 = vmatpush1.xpose.msra.mxu0 0.0
    %627 = vmatprep.subr.mxu0 0.0
    %628 = vmatpush1.xpose.msra.mxu0 0.0
    %629 = vmatprep.subr.mxu0 0.0
    %630 = vmatpush1.xpose.msra.mxu0 0.0
    %631 = vmatprep.subr.mxu0 0.0
    %632 = vmatpush1.xpose.msra.mxu0 0.0
    %633 = vmatprep.subr.mxu0 0.0
    %634 = vmatpush1.xpose.msra.mxu0 0.0
    %635 = vmatprep.subr.mxu0 0.0
    %636 = vmatpush1.xpose.msra.mxu0 0.0
    %637 = vmatprep.subr.mxu0 0.0
    %638 = vmatpush1.xpose.msra.mxu0 0.0
    %639 = vmatprep.subr.mxu0 0.0
    %640 = vmatpush1.xpose.msra.mxu0 0.0
    %641 = vmatprep.subr.mxu0 0.0
    %642 = vmatpush1.xpose.msra.mxu0 0.0
    %643 = vmatprep.subr.mxu0 0.0
    %644 = vmatpush1.xpose.msra.mxu0 0.0
    %645 = vmatprep.subr.mxu0 0.0
    %646 = vmatpush1.xpose.msra.mxu0 0.0
    %647 = vmatprep.subr.mxu0 0.0
    %648 = vmatpush1.xpose.msra.mxu0 0.0
    %649 = vmatprep.subr.mxu0 0.0
    %650 = vmatpush1.xpose.msra.mxu0 0.0
    %651 = vmatprep.subr.mxu0 0.0
    %652 = vmatpush1.xpose.msra.mxu0 0.0
    %653 = vmatprep.subr.mxu0 0.0
    %654 = vmatpush1.xpose.msra.mxu0 0.0
    %655 = vmatprep.subr.mxu0 0.0
    %656 = vmatpush1.xpose.msra.mxu0 0.0
    %657 = vmatprep.subr.mxu0 0.0
    %658 = vmatpush1.xpose.msra.mxu0 0.0
    %659 = vmatprep.subr.mxu0 0.0
    %660 = vmatpush1.xpose.msra.mxu0 0.0
    %661 = vmatprep.subr.mxu0 0.0
    %662 = vmatpush1.xpose.msra.mxu0 0.0
    %663 = vmatprep.subr.mxu0 0.0
    %664 = vmatpush1.xpose.msra.mxu0 0.0
    %665 = vmatprep.subr.mxu0 0.0
    %666 = vmatpush1.xpose.msra.mxu0 0.0
    %667 = vmatprep.subr.mxu0 0.0
    %668 = vmatpush1.xpose.msra.mxu0 0.0
    %669 = vmatprep.subr.mxu0 0.0
    %670 = vmatpush1.xpose.msra.mxu0 0.0
    %671 = vmatprep.mubr.f32.mxu0 0.0
    %v672 = vand.u32 %v604, 4294901760
    %v673 = vsub.f32 %v604, %v672
    %v674 = vand.u32 %v673, 4294901760
    %v675 = vsub.f32 %v673, %v674
    %v676 = vand.u32 %v675, 4294901760
    %677 = vmatmul.mubr.f32.gmra.mrb[0].mxu0 %v676
    %v678 = vpop.f32.mrb[0].mxu0
    %v679 = vadd.f32 0.0, %v678
    %v680 = vpop.f32.mrb[0].mxu0
    %681 = vdwg.mxu0
    %682 = vmatprep.subr.mxu0 0.0
    %v683 = vand.u32 %v604, 4294901760
    %v684 = vsub.f32 %v604, %v683
    %v685 = vand.u32 %v684, 4294901760
    %v686 = vsub.f32 %v684, %v685
    %v687 = vand.u32 %v686, 4294901760
    %688 = vmatpush1.xpose.msra.mxu0 %v687
    %689 = vmatprep.subr.mxu0 0.0
    %690 = vmatpush1.xpose.msra.mxu0 0.0
    %691 = vmatprep.subr.mxu0 0.0
    %692 = vmatpush1.xpose.msra.mxu0 0.0
    %693 = vmatprep.subr.mxu0 0.0
    %694 = vmatpush1.xpose.msra.mxu0 0.0
    %695 = vmatprep.subr.mxu0 0.0
    %696 = vmatpush1.xpose.msra.mxu0 0.0
    %697 = vmatprep.subr.mxu0 0.0
    %698 = vmatpush1.xpose.msra.mxu0 0.0
    %699 = vmatprep.subr.mxu0 0.0
    %700 = vmatpush1.xpose.msra.mxu0 0.0
    %701 = vmatprep.subr.mxu0 0.0
    %702 = vmatpush1.xpose.msra.mxu0 0.0
    %703 = vmatprep.subr.mxu0 0.0
    %704 = vmatpush1.xpose.msra.mxu0 0.0
    %705 = vmatprep.subr.mxu0 0.0
    %706 = vmatpush1.xpose.msra.mxu0 0.0
    %707 = vmatprep.subr.mxu0 0.0
    %708 = vmatpush1.xpose.msra.mxu0 0.0
    %709 = vmatprep.subr.mxu0 0.0
    %710 = vmatpush1.xpose.msra.mxu0 0.0
    %711 = vmatprep.subr.mxu0 0.0
    %712 = vmatpush1.xpose.msra.mxu0 0.0
    %713 = vmatprep.subr.mxu0 0.0
    %714 = vmatpush1.xpose.msra.mxu0 0.0
    %715 = vmatprep.subr.mxu0 0.0
    %716 = vmatpush1.xpose.msra.mxu0 0.0
    %717 = vmatprep.subr.mxu0 0.0
    %718 = vmatpush1.xpose.msra.mxu0 0.0
    %719 = vmatprep.subr.mxu0 0.0
    %720 = vmatpush1.xpose.msra.mxu0 0.0
    %721 = vmatprep.subr.mxu0 0.0
    %722 = vmatpush1.xpose.msra.mxu0 0.0
    %723 = vmatprep.subr.mxu0 0.0
    %724 = vmatpush1.xpose.msra.mxu0 0.0
    %725 = vmatprep.subr.mxu0 0.0
    %726 = vmatpush1.xpose.msra.mxu0 0.0
    %727 = vmatprep.subr.mxu0 0.0
    %728 = vmatpush1.xpose.msra.mxu0 0.0
    %729 = vmatprep.subr.mxu0 0.0
    %730 = vmatpush1.xpose.msra.mxu0 0.0
    %731 = vmatprep.subr.mxu0 0.0
    %732 = vmatpush1.xpose.msra.mxu0 0.0
    %733 = vmatprep.subr.mxu0 0.0
    %734 = vmatpush1.xpose.msra.mxu0 0.0
    %735 = vmatprep.subr.mxu0 0.0
    %736 = vmatpush1.xpose.msra.mxu0 0.0
    %737 = vmatprep.subr.mxu0 0.0
    %738 = vmatpush1.xpose.msra.mxu0 0.0
    %739 = vmatprep.subr.mxu0 0.0
    %740 = vmatpush1.xpose.msra.mxu0 0.0
    %741 = vmatprep.subr.mxu0 0.0
    %742 = vmatpush1.xpose.msra.mxu0 0.0
    %743 = vmatprep.subr.mxu0 0.0
    %744 = vmatpush1.xpose.msra.mxu0 0.0
    %745 = vmatprep.subr.mxu0 0.0
    %746 = vmatpush1.xpose.msra.mxu0 0.0
    %747 = vmatprep.subr.mxu0 0.0
    %748 = vmatpush1.xpose.msra.mxu0 0.0
    %749 = vmatprep.subr.mxu0 0.0
    %750 = vmatpush1.xpose.msra.mxu0 0.0
    %751 = vmatprep.mubr.f32.mxu0 0.0
    %v752 = vand.u32 %v604, 4294901760
    %753 = vmatmul.mubr.f32.gmra.mrb[0].mxu0 %v752
    %v754 = vpop.f32.mrb[0].mxu0
    %v755 = vadd.f32 %v679, %v754
    %v756 = vpop.f32.mrb[0].mxu0
    %757 = vdwg.mxu0
    %758 = vmatprep.subr.mxu0 0.0
    %v759 = vand.u32 %v604, 4294901760
    %v760 = vsub.f32 %v604, %v759
    %761 = vmatpush1.xpose.msra.mxu0 %v760
    %762 = vmatprep.subr.mxu0 0.0
    %763 = vmatpush1.xpose.msra.mxu0 0.0
    %764 = vmatprep.subr.mxu0 0.0
    %765 = vmatpush1.xpose.msra.mxu0 0.0
    %766 = vmatprep.subr.mxu0 0.0
    %767 = vmatpush1.xpose.msra.mxu0 0.0
    %768 = vmatprep.subr.mxu0 0.0
    %769 = vmatpush1.xpose.msra.mxu0 0.0
    %770 = vmatprep.subr.mxu0 0.0
    %771 = vmatpush1.xpose.msra.mxu0 0.0
    %772 = vmatprep.subr.mxu0 0.0
    %773 = vmatpush1.xpose.msra.mxu0 0.0
    %774 = vmatprep.subr.mxu0 0.0
    %775 = vmatpush1.xpose.msra.mxu0 0.0
    %776 = vmatprep.subr.mxu0 0.0
    %777 = vmatpush1.xpose.msra.mxu0 0.0
    %778 = vmatprep.subr.mxu0 0.0
    %779 = vmatpush1.xpose.msra.mxu0 0.0
    %780 = vmatprep.subr.mxu0 0.0
    %781 = vmatpush1.xpose.msra.mxu0 0.0
    %782 = vmatprep.subr.mxu0 0.0
    %783 = vmatpush1.xpose.msra.mxu0 0.0
    %784 = vmatprep.subr.mxu0 0.0
    %785 = vmatpush1.xpose.msra.mxu0 0.0
    %786 = vmatprep.subr.mxu0 0.0
    %787 = vmatpush1.xpose.msra.mxu0 0.0
    %788 = vmatprep.subr.mxu0 0.0
    %789 = vmatpush1.xpose.msra.mxu0 0.0
    %790 = vmatprep.subr.mxu0 0.0
    %791 = vmatpush1.xpose.msra.mxu0 0.0
    %792 = vmatprep.subr.mxu0 0.0
    %793 = vmatpush1.xpose.msra.mxu0 0.0
    %794 = vmatprep.subr.mxu0 0.0
    %795 = vmatpush1.xpose.msra.mxu0 0.0
    %796 = vmatprep.subr.mxu0 0.0
    %797 = vmatpush1.xpose.msra.mxu0 0.0
    %798 = vmatprep.subr.mxu0 0.0
    %799 = vmatpush1.xpose.msra.mxu0 0.0
    %800 = vmatprep.subr.mxu0 0.0
    %801 = vmatpush1.xpose.msra.mxu0 0.0
    %802 = vmatprep.subr.mxu0 0.0
    %803 = vmatpush1.xpose.msra.mxu0 0.0
    %804 = vmatprep.subr.mxu0 0.0
    %805 = vmatpush1.xpose.msra.mxu0 0.0
    %806 = vmatprep.subr.mxu0 0.0
    %807 = vmatpush1.xpose.msra.mxu0 0.0
    %808 = vmatprep.subr.mxu0 0.0
    %809 = vmatpush1.xpose.msra.mxu0 0.0
    %810 = vmatprep.subr.mxu0 0.0
    %811 = vmatpush1.xpose.msra.mxu0 0.0
    %812 = vmatprep.subr.mxu0 0.0
    %813 = vmatpush1.xpose.msra.mxu0 0.0
    %814 = vmatprep.subr.mxu0 0.0
    %815 = vmatpush1.xpose.msra.mxu0 0.0
    %816 = vmatprep.subr.mxu0 0.0
    %817 = vmatpush1.xpose.msra.mxu0 0.0
    %818 = vmatprep.subr.mxu0 0.0
    %819 = vmatpush1.xpose.msra.mxu0 0.0
    %820 = vmatprep.subr.mxu0 0.0
    %821 = vmatpush1.xpose.msra.mxu0 0.0
    %822 = vmatprep.subr.mxu0 0.0
    %823 = vmatpush1.xpose.msra.mxu0 0.0
    %824 = vmatprep.mubr.f32.mxu0 0.0
    %v825 = vand.u32 %v604, 4294901760
    %v826 = vsub.f32 %v604, %v825
    %827 = vmatmul.mubr.f32.gmra.mrb[0].mxu0 %v826
    %v828 = vpop.f32.mrb[0].mxu0
    %v829 = vadd.f32 %v755, %v828
    %v830 = vpop.f32.mrb[0].mxu0
    %831 = vdwg.mxu0
    %832 = vmatprep.subr.mxu0 0.0
    %v833 = vand.u32 %v604, 4294901760
    %834 = vmatpush1.xpose.msra.mxu0 %v833
    %835 = vmatprep.subr.mxu0 0.0
    %836 = vmatpush1.xpose.msra.mxu0 0.0
    %837 = vmatprep.subr.mxu0 0.0
    %838 = vmatpush1.xpose.msra.mxu0 0.0
    %839 = vmatprep.subr.mxu0 0.0
    %840 = vmatpush1.xpose.msra.mxu0 0.0
    %841 = vmatprep.subr.mxu0 0.0
    %842 = vmatpush1.xpose.msra.mxu0 0.0
    %843 = vmatprep.subr.mxu0 0.0
    %844 = vmatpush1.xpose.msra.mxu0 0.0
    %845 = vmatprep.subr.mxu0 0.0
    %846 = vmatpush1.xpose.msra.mxu0 0.0
    %847 = vmatprep.subr.mxu0 0.0
    %848 = vmatpush1.xpose.msra.mxu0 0.0
    %849 = vmatprep.subr.mxu0 0.0
    %850 = vmatpush1.xpose.msra.mxu0 0.0
    %851 = vmatprep.subr.mxu0 0.0
    %852 = vmatpush1.xpose.msra.mxu0 0.0
    %853 = vmatprep.subr.mxu0 0.0
    %854 = vmatpush1.xpose.msra.mxu0 0.0
    %855 = vmatprep.subr.mxu0 0.0
    %856 = vmatpush1.xpose.msra.mxu0 0.0
    %857 = vmatprep.subr.mxu0 0.0
    %858 = vmatpush1.xpose.msra.mxu0 0.0
    %859 = vmatprep.subr.mxu0 0.0
    %860 = vmatpush1.xpose.msra.mxu0 0.0
    %861 = vmatprep.subr.mxu0 0.0
    %862 = vmatpush1.xpose.msra.mxu0 0.0
    %863 = vmatprep.subr.mxu0 0.0
    %864 = vmatpush1.xpose.msra.mxu0 0.0
    %865 = vmatprep.subr.mxu0 0.0
    %866 = vmatpush1.xpose.msra.mxu0 0.0
    %867 = vmatprep.subr.mxu0 0.0
    %868 = vmatpush1.xpose.msra.mxu0 0.0
    %869 = vmatprep.subr.mxu0 0.0
    %870 = vmatpush1.xpose.msra.mxu0 0.0
    %871 = vmatprep.subr.mxu0 0.0
    %872 = vmatpush1.xpose.msra.mxu0 0.0
    %873 = vmatprep.subr.mxu0 0.0
    %874 = vmatpush1.xpose.msra.mxu0 0.0
    %875 = vmatprep.subr.mxu0 0.0
    %876 = vmatpush1.xpose.msra.mxu0 0.0
    %877 = vmatprep.subr.mxu0 0.0
    %878 = vmatpush1.xpose.msra.mxu0 0.0
    %879 = vmatprep.subr.mxu0 0.0
    %880 = vmatpush1.xpose.msra.mxu0 0.0
    %881 = vmatprep.subr.mxu0 0.0
    %882 = vmatpush1.xpose.msra.mxu0 0.0
    %883 = vmatprep.subr.mxu0 0.0
    %884 = vmatpush1.xpose.msra.mxu0 0.0
    %885 = vmatprep.subr.mxu0 0.0
    %886 = vmatpush1.xpose.msra.mxu0 0.0
    %887 = vmatprep.subr.mxu0 0.0
    %888 = vmatpush1.xpose.msra.mxu0 0.0
    %889 = vmatprep.subr.mxu0 0.0
    %890 = vmatpush1.xpose.msra.mxu0 0.0
    %891 = vmatprep.subr.mxu0 0.0
    %892 = vmatpush1.xpose.msra.mxu0 0.0
    %893 = vmatprep.subr.mxu0 0.0
    %894 = vmatpush1.xpose.msra.mxu0 0.0
    %895 = vmatprep.subr.mxu0 0.0
    %896 = vmatpush1.xpose.msra.mxu0 0.0
    %897 = vmatprep.mubr.f32.mxu0 0.0
    %v898 = vand.u32 %v604, 4294901760
    %v899 = vsub.f32 %v604, %v898
    %v900 = vand.u32 %v899, 4294901760
    %901 = vmatmul.mubr.f32.gmra.mrb[0].mxu0 %v900
    %v902 = vpop.f32.mrb[0].mxu0
    %v903 = vadd.f32 %v829, %v902
    %v904 = vpop.f32.mrb[0].mxu0
    %905 = vdwg.mxu0
    %906 = vmatprep.subr.mxu0 0.0
    %v907 = vand.u32 %v604, 4294901760
    %v908 = vsub.f32 %v604, %v907
    %v909 = vand.u32 %v908, 4294901760
    %910 = vmatpush1.xpose.msra.mxu0 %v909
    %911 = vmatprep.subr.mxu0 0.0
    %912 = vmatpush1.xpose.msra.mxu0 0.0
    %913 = vmatprep.subr.mxu0 0.0
    %914 = vmatpush1.xpose.msra.mxu0 0.0
    %915 = vmatprep.subr.mxu0 0.0
    %916 = vmatpush1.xpose.msra.mxu0 0.0
    %917 = vmatprep.subr.mxu0 0.0
    %918 = vmatpush1.xpose.msra.mxu0 0.0
    %919 = vmatprep.subr.mxu0 0.0
    %920 = vmatpush1.xpose.msra.mxu0 0.0
    %921 = vmatprep.subr.mxu0 0.0
    %922 = vmatpush1.xpose.msra.mxu0 0.0
    %923 = vmatprep.subr.mxu0 0.0
    %924 = vmatpush1.xpose.msra.mxu0 0.0
    %925 = vmatprep.subr.mxu0 0.0
    %926 = vmatpush1.xpose.msra.mxu0 0.0
    %927 = vmatprep.subr.mxu0 0.0
    %928 = vmatpush1.xpose.msra.mxu0 0.0
    %929 = vmatprep.subr.mxu0 0.0
    %930 = vmatpush1.xpose.msra.mxu0 0.0
    %931 = vmatprep.subr.mxu0 0.0
    %932 = vmatpush1.xpose.msra.mxu0 0.0
    %933 = vmatprep.subr.mxu0 0.0
    %934 = vmatpush1.xpose.msra.mxu0 0.0
    %935 = vmatprep.subr.mxu0 0.0
    %936 = vmatpush1.xpose.msra.mxu0 0.0
    %937 = vmatprep.subr.mxu0 0.0
    %938 = vmatpush1.xpose.msra.mxu0 0.0
    %939 = vmatprep.subr.mxu0 0.0
    %940 = vmatpush1.xpose.msra.mxu0 0.0
    %941 = vmatprep.subr.mxu0 0.0
    %942 = vmatpush1.xpose.msra.mxu0 0.0
    %943 = vmatprep.subr.mxu0 0.0
    %944 = vmatpush1.xpose.msra.mxu0 0.0
    %945 = vmatprep.subr.mxu0 0.0
    %946 = vmatpush1.xpose.msra.mxu0 0.0
    %947 = vmatprep.subr.mxu0 0.0
    %948 = vmatpush1.xpose.msra.mxu0 0.0
    %949 = vmatprep.subr.mxu0 0.0
    %950 = vmatpush1.xpose.msra.mxu0 0.0
    %951 = vmatprep.subr.mxu0 0.0
    %952 = vmatpush1.xpose.msra.mxu0 0.0
    %953 = vmatprep.subr.mxu0 0.0
    %954 = vmatpush1.xpose.msra.mxu0 0.0
    %955 = vmatprep.subr.mxu0 0.0
    %956 = vmatpush1.xpose.msra.mxu0 0.0
    %957 = vmatprep.subr.mxu0 0.0
    %958 = vmatpush1.xpose.msra.mxu0 0.0
    %959 = vmatprep.subr.mxu0 0.0
    %960 = vmatpush1.xpose.msra.mxu0 0.0
    %961 = vmatprep.subr.mxu0 0.0
    %962 = vmatpush1.xpose.msra.mxu0 0.0
    %963 = vmatprep.subr.mxu0 0.0
    %964 = vmatpush1.xpose.msra.mxu0 0.0
    %965 = vmatprep.subr.mxu0 0.0
    %966 = vmatpush1.xpose.msra.mxu0 0.0
    %967 = vmatprep.subr.mxu0 0.0
    %968 = vmatpush1.xpose.msra.mxu0 0.0
    %969 = vmatprep.subr.mxu0 0.0
    %970 = vmatpush1.xpose.msra.mxu0 0.0
    %971 = vmatprep.subr.mxu0 0.0
    %972 = vmatpush1.xpose.msra.mxu0 0.0
    %973 = vmatprep.mubr.f32.mxu0 0.0
    %v974 = vand.u32 %v604, 4294901760
    %975 = vmatmul.mubr.f32.gmra.mrb[0].mxu0 %v974
    %v976 = vpop.f32.mrb[0].mxu0
    %v977 = vadd.f32 %v903, %v976
    %v978 = vpop.f32.mrb[0].mxu0
    %979 = vdwg.mxu0
    %980 = vmatprep.subr.mxu0 0.0
    %v981 = vand.u32 %v604, 4294901760
    %982 = vmatpush1.xpose.msra.mxu0 %v981
    %983 = vmatprep.subr.mxu0 0.0
    %984 = vmatpush1.xpose.msra.mxu0 0.0
    %985 = vmatprep.subr.mxu0 0.0
    %986 = vmatpush1.xpose.msra.mxu0 0.0
    %987 = vmatprep.subr.mxu0 0.0
    %988 = vmatpush1.xpose.msra.mxu0 0.0
    %989 = vmatprep.subr.mxu0 0.0
    %990 = vmatpush1.xpose.msra.mxu0 0.0
    %991 = vmatprep.subr.mxu0 0.0
    %992 = vmatpush1.xpose.msra.mxu0 0.0
    %993 = vmatprep.subr.mxu0 0.0
    %994 = vmatpush1.xpose.msra.mxu0 0.0
    %995 = vmatprep.subr.mxu0 0.0
    %996 = vmatpush1.xpose.msra.mxu0 0.0
    %997 = vmatprep.subr.mxu0 0.0
    %998 = vmatpush1.xpose.msra.mxu0 0.0
    %999 = vmatprep.subr.mxu0 0.0
    %1000 = vmatpush1.xpose.msra.mxu0 0.0
    %1001 = vmatprep.subr.mxu0 0.0
    %1002 = vmatpush1.xpose.msra.mxu0 0.0
    %1003 = vmatprep.subr.mxu0 0.0
    %1004 = vmatpush1.xpose.msra.mxu0 0.0
    %1005 = vmatprep.subr.mxu0 0.0
    %1006 = vmatpush1.xpose.msra.mxu0 0.0
    %1007 = vmatprep.subr.mxu0 0.0
    %1008 = vmatpush1.xpose.msra.mxu0 0.0
    %1009 = vmatprep.subr.mxu0 0.0
    %1010 = vmatpush1.xpose.msra.mxu0 0.0
    %1011 = vmatprep.subr.mxu0 0.0
    %1012 = vmatpush1.xpose.msra.mxu0 0.0
    %1013 = vmatprep.subr.mxu0 0.0
    %1014 = vmatpush1.xpose.msra.mxu0 0.0
    %1015 = vmatprep.subr.mxu0 0.0
    %1016 = vmatpush1.xpose.msra.mxu0 0.0
    %1017 = vmatprep.subr.mxu0 0.0
    %1018 = vmatpush1.xpose.msra.mxu0 0.0
    %1019 = vmatprep.subr.mxu0 0.0
    %1020 = vmatpush1.xpose.msra.mxu0 0.0
    %1021 = vmatprep.subr.mxu0 0.0
    %1022 = vmatpush1.xpose.msra.mxu0 0.0
    %1023 = vmatprep.subr.mxu0 0.0
    %1024 = vmatpush1.xpose.msra.mxu0 0.0
    %1025 = vmatprep.subr.mxu0 0.0
    %1026 = vmatpush1.xpose.msra.mxu0 0.0
    %1027 = vmatprep.subr.mxu0 0.0
    %1028 = vmatpush1.xpose.msra.mxu0 0.0
    %1029 = vmatprep.subr.mxu0 0.0
    %1030 = vmatpush1.xpose.msra.mxu0 0.0
    %1031 = vmatprep.subr.mxu0 0.0
    %1032 = vmatpush1.xpose.msra.mxu0 0.0
    %1033 = vmatprep.subr.mxu0 0.0
    %1034 = vmatpush1.xpose.msra.mxu0 0.0
    %1035 = vmatprep.subr.mxu0 0.0
    %1036 = vmatpush1.xpose.msra.mxu0 0.0
    %1037 = vmatprep.subr.mxu0 0.0
    %1038 = vmatpush1.xpose.msra.mxu0 0.0
    %1039 = vmatprep.subr.mxu0 0.0
    %1040 = vmatpush1.xpose.msra.mxu0 0.0
    %1041 = vmatprep.subr.mxu0 0.0
    %1042 = vmatpush1.xpose.msra.mxu0 0.0
    %1043 = vmatprep.subr.mxu0 0.0
    %1044 = vmatpush1.xpose.msra.mxu0 0.0
    %1045 = vmatprep.mubr.f32.mxu0 0.0
    %v1046 = vand.u32 %v604, 4294901760
    %1047 = vmatmul.mubr.f32.gmra.mrb[0].mxu0 %v1046
    %v1048 = vpop.f32.mrb[0].mxu0
    %v1049 = vadd.f32 %v977, %v1048
    %v1050 = vpop.f32.mrb[0].mxu0
    %1051 = vdwg.mxu0
    %v1053 = vsel %vm56, %v600, 0
    %1055 = vmatprep.subr.mxu0 0.0
    %v1056 = vand.u32 %v1053, 4294901760
    %1057 = vmatpush1.xpose.msra.mxu0 %v1056
    %1058 = vmatprep.subr.mxu0 0.0
    %1059 = vmatpush1.xpose.msra.mxu0 0.0
    %1060 = vmatprep.subr.mxu0 0.0
    %1061 = vmatpush1.xpose.msra.mxu0 0.0
    %1062 = vmatprep.subr.mxu0 0.0
    %1063 = vmatpush1.xpose.msra.mxu0 0.0
    %1064 = vmatprep.subr.mxu0 0.0
    %1065 = vmatpush1.xpose.msra.mxu0 0.0
    %1066 = vmatprep.subr.mxu0 0.0
    %1067 = vmatpush1.xpose.msra.mxu0 0.0
    %1068 = vmatprep.subr.mxu0 0.0
    %1069 = vmatpush1.xpose.msra.mxu0 0.0
    %1070 = vmatprep.subr.mxu0 0.0
    %1071 = vmatpush1.xpose.msra.mxu0 0.0
    %1072 = vmatprep.subr.mxu0 0.0
    %1073 = vmatpush1.xpose.msra.mxu0 0.0
    %1074 = vmatprep.subr.mxu0 0.0
    %1075 = vmatpush1.xpose.msra.mxu0 0.0
    %1076 = vmatprep.subr.mxu0 0.0
    %1077 = vmatpush1.xpose.msra.mxu0 0.0
    %1078 = vmatprep.subr.mxu0 0.0
    %1079 = vmatpush1.xpose.msra.mxu0 0.0
    %1080 = vmatprep.subr.mxu0 0.0
    %1081 = vmatpush1.xpose.msra.mxu0 0.0
    %1082 = vmatprep.subr.mxu0 0.0
    %1083 = vmatpush1.xpose.msra.mxu0 0.0
    %1084 = vmatprep.subr.mxu0 0.0
    %1085 = vmatpush1.xpose.msra.mxu0 0.0
    %1086 = vmatprep.subr.mxu0 0.0
    %1087 = vmatpush1.xpose.msra.mxu0 0.0
    %1088 = vmatprep.subr.mxu0 0.0
    %1089 = vmatpush1.xpose.msra.mxu0 0.0
    %1090 = vmatprep.subr.mxu0 0.0
    %1091 = vmatpush1.xpose.msra.mxu0 0.0
    %1092 = vmatprep.subr.mxu0 0.0
    %1093 = vmatpush1.xpose.msra.mxu0 0.0
    %1094 = vmatprep.subr.mxu0 0.0
    %1095 = vmatpush1.xpose.msra.mxu0 0.0
    %1096 = vmatprep.subr.mxu0 0.0
    %1097 = vmatpush1.xpose.msra.mxu0 0.0
    %1098 = vmatprep.subr.mxu0 0.0
    %1099 = vmatpush1.xpose.msra.mxu0 0.0
    %1100 = vmatprep.subr.mxu0 0.0
    %1101 = vmatpush1.xpose.msra.mxu0 0.0
    %1102 = vmatprep.subr.mxu0 0.0
    %1103 = vmatpush1.xpose.msra.mxu0 0.0
    %1104 = vmatprep.subr.mxu0 0.0
    %1105 = vmatpush1.xpose.msra.mxu0 0.0
    %1106 = vmatprep.subr.mxu0 0.0
    %1107 = vmatpush1.xpose.msra.mxu0 0.0
    %1108 = vmatprep.subr.mxu0 0.0
    %1109 = vmatpush1.xpose.msra.mxu0 0.0
    %1110 = vmatprep.subr.mxu0 0.0
    %1111 = vmatpush1.xpose.msra.mxu0 0.0
    %1112 = vmatprep.subr.mxu0 0.0
    %1113 = vmatpush1.xpose.msra.mxu0 0.0
    %1114 = vmatprep.subr.mxu0 0.0
    %1115 = vmatpush1.xpose.msra.mxu0 0.0
    %1116 = vmatprep.subr.mxu0 0.0
    %1117 = vmatpush1.xpose.msra.mxu0 0.0
    %1118 = vmatprep.subr.mxu0 0.0
    %1119 = vmatpush1.xpose.msra.mxu0 0.0
    %1120 = vmatprep.mubr.f32.mxu0 0.0
    %v1121 = vand.u32 %v1053, 4294901760
    %v1122 = vsub.f32 %v1053, %v1121
    %v1123 = vand.u32 %v1122, 4294901760
    %v1124 = vsub.f32 %v1122, %v1123
    %v1125 = vand.u32 %v1124, 4294901760
    %1126 = vmatmul.mubr.f32.gmra.mrb[0].mxu0 %v1125
    %v1127 = vpop.f32.mrb[0].mxu0
    %v1128 = vadd.f32 0.0, %v1127
    %v1129 = vpop.f32.mrb[0].mxu0
    %1130 = vdwg.mxu0
    %1131 = vmatprep.subr.mxu0 0.0
    %v1132 = vand.u32 %v1053, 4294901760
    %v1133 = vsub.f32 %v1053, %v1132
    %v1134 = vand.u32 %v1133, 4294901760
    %v1135 = vsub.f32 %v1133, %v1134
    %v1136 = vand.u32 %v1135, 4294901760
    %1137 = vmatpush1.xpose.msra.mxu0 %v1136
    %1138 = vmatprep.subr.mxu0 0.0
    %1139 = vmatpush1.xpose.msra.mxu0 0.0
    %1140 = vmatprep.subr.mxu0 0.0
    %1141 = vmatpush1.xpose.msra.mxu0 0.0
    %1142 = vmatprep.subr.mxu0 0.0
    %1143 = vmatpush1.xpose.msra.mxu0 0.0
    %1144 = vmatprep.subr.mxu0 0.0
    %1145 = vmatpush1.xpose.msra.mxu0 0.0
    %1146 = vmatprep.subr.mxu0 0.0
    %1147 = vmatpush1.xpose.msra.mxu0 0.0
    %1148 = vmatprep.subr.mxu0 0.0
    %1149 = vmatpush1.xpose.msra.mxu0 0.0
    %1150 = vmatprep.subr.mxu0 0.0
    %1151 = vmatpush1.xpose.msra.mxu0 0.0
    %1152 = vmatprep.subr.mxu0 0.0
    %1153 = vmatpush1.xpose.msra.mxu0 0.0
    %1154 = vmatprep.subr.mxu0 0.0
    %1155 = vmatpush1.xpose.msra.mxu0 0.0
    %1156 = vmatprep.subr.mxu0 0.0
    %1157 = vmatpush1.xpose.msra.mxu0 0.0
    %1158 = vmatprep.subr.mxu0 0.0
    %1159 = vmatpush1.xpose.msra.mxu0 0.0
    %1160 = vmatprep.subr.mxu0 0.0
    %1161 = vmatpush1.xpose.msra.mxu0 0.0
    %1162 = vmatprep.subr.mxu0 0.0
    %1163 = vmatpush1.xpose.msra.mxu0 0.0
    %1164 = vmatprep.subr.mxu0 0.0
    %1165 = vmatpush1.xpose.msra.mxu0 0.0
    %1166 = vmatprep.subr.mxu0 0.0
    %1167 = vmatpush1.xpose.msra.mxu0 0.0
    %1168 = vmatprep.subr.mxu0 0.0
    %1169 = vmatpush1.xpose.msra.mxu0 0.0
    %1170 = vmatprep.subr.mxu0 0.0
    %1171 = vmatpush1.xpose.msra.mxu0 0.0
    %1172 = vmatprep.subr.mxu0 0.0
    %1173 = vmatpush1.xpose.msra.mxu0 0.0
    %1174 = vmatprep.subr.mxu0 0.0
    %1175 = vmatpush1.xpose.msra.mxu0 0.0
    %1176 = vmatprep.subr.mxu0 0.0
    %1177 = vmatpush1.xpose.msra.mxu0 0.0
    %1178 = vmatprep.subr.mxu0 0.0
    %1179 = vmatpush1.xpose.msra.mxu0 0.0
    %1180 = vmatprep.subr.mxu0 0.0
    %1181 = vmatpush1.xpose.msra.mxu0 0.0
    %1182 = vmatprep.subr.mxu0 0.0
    %1183 = vmatpush1.xpose.msra.mxu0 0.0
    %1184 = vmatprep.subr.mxu0 0.0
    %1185 = vmatpush1.xpose.msra.mxu0 0.0
    %1186 = vmatprep.subr.mxu0 0.0
    %1187 = vmatpush1.xpose.msra.mxu0 0.0
    %1188 = vmatprep.subr.mxu0 0.0
    %1189 = vmatpush1.xpose.msra.mxu0 0.0
    %1190 = vmatprep.subr.mxu0 0.0
    %1191 = vmatpush1.xpose.msra.mxu0 0.0
    %1192 = vmatprep.subr.mxu0 0.0
    %1193 = vmatpush1.xpose.msra.mxu0 0.0
    %1194 = vmatprep.subr.mxu0 0.0
    %1195 = vmatpush1.xpose.msra.mxu0 0.0
    %1196 = vmatprep.subr.mxu0 0.0
    %1197 = vmatpush1.xpose.msra.mxu0 0.0
    %1198 = vmatprep.subr.mxu0 0.0
    %1199 = vmatpush1.xpose.msra.mxu0 0.0
    %1200 = vmatprep.mubr.f32.mxu0 0.0
    %v1201 = vand.u32 %v1053, 4294901760
    %1202 = vmatmul.mubr.f32.gmra.mrb[0].mxu0 %v1201
    %v1203 = vpop.f32.mrb[0].mxu0
    %v1204 = vadd.f32 %v1128, %v1203
    %v1205 = vpop.f32.mrb[0].mxu0
    %1206 = vdwg.mxu0
    %1207 = vmatprep.subr.mxu0 0.0
    %v1208 = vand.u32 %v1053, 4294901760
    %v1209 = vsub.f32 %v1053, %v1208
    %1210 = vmatpush1.xpose.msra.mxu0 %v1209
    %1211 = vmatprep.subr.mxu0 0.0
    %1212 = vmatpush1.xpose.msra.mxu0 0.0
    %1213 = vmatprep.subr.mxu0 0.0
    %1214 = vmatpush1.xpose.msra.mxu0 0.0
    %1215 = vmatprep.subr.mxu0 0.0
    %1216 = vmatpush1.xpose.msra.mxu0 0.0
    %1217 = vmatprep.subr.mxu0 0.0
    %1218 = vmatpush1.xpose.msra.mxu0 0.0
    %1219 = vmatprep.subr.mxu0 0.0
    %1220 = vmatpush1.xpose.msra.mxu0 0.0
    %1221 = vmatprep.subr.mxu0 0.0
    %1222 = vmatpush1.xpose.msra.mxu0 0.0
    %1223 = vmatprep.subr.mxu0 0.0
    %1224 = vmatpush1.xpose.msra.mxu0 0.0
    %1225 = vmatprep.subr.mxu0 0.0
    %1226 = vmatpush1.xpose.msra.mxu0 0.0
    %1227 = vmatprep.subr.mxu0 0.0
    %1228 = vmatpush1.xpose.msra.mxu0 0.0
    %1229 = vmatprep.subr.mxu0 0.0
    %1230 = vmatpush1.xpose.msra.mxu0 0.0
    %1231 = vmatprep.subr.mxu0 0.0
    %1232 = vmatpush1.xpose.msra.mxu0 0.0
    %1233 = vmatprep.subr.mxu0 0.0
    %1234 = vmatpush1.xpose.msra.mxu0 0.0
    %1235 = vmatprep.subr.mxu0 0.0
    %1236 = vmatpush1.xpose.msra.mxu0 0.0
    %1237 = vmatprep.subr.mxu0 0.0
    %1238 = vmatpush1.xpose.msra.mxu0 0.0
    %1239 = vmatprep.subr.mxu0 0.0
    %1240 = vmatpush1.xpose.msra.mxu0 0.0
    %1241 = vmatprep.subr.mxu0 0.0
    %1242 = vmatpush1.xpose.msra.mxu0 0.0
    %1243 = vmatprep.subr.mxu0 0.0
    %1244 = vmatpush1.xpose.msra.mxu0 0.0
    %1245 = vmatprep.subr.mxu0 0.0
    %1246 = vmatpush1.xpose.msra.mxu0 0.0
    %1247 = vmatprep.subr.mxu0 0.0
    %1248 = vmatpush1.xpose.msra.mxu0 0.0
    %1249 = vmatprep.subr.mxu0 0.0
    %1250 = vmatpush1.xpose.msra.mxu0 0.0
    %1251 = vmatprep.subr.mxu0 0.0
    %1252 = vmatpush1.xpose.msra.mxu0 0.0
    %1253 = vmatprep.subr.mxu0 0.0
    %1254 = vmatpush1.xpose.msra.mxu0 0.0
    %1255 = vmatprep.subr.mxu0 0.0
    %1256 = vmatpush1.xpose.msra.mxu0 0.0
    %1257 = vmatprep.subr.mxu0 0.0
    %1258 = vmatpush1.xpose.msra.mxu0 0.0
    %1259 = vmatprep.subr.mxu0 0.0
    %1260 = vmatpush1.xpose.msra.mxu0 0.0
    %1261 = vmatprep.subr.mxu0 0.0
    %1262 = vmatpush1.xpose.msra.mxu0 0.0
    %1263 = vmatprep.subr.mxu0 0.0
    %1264 = vmatpush1.xpose.msra.mxu0 0.0
    %1265 = vmatprep.subr.mxu0 0.0
    %1266 = vmatpush1.xpose.msra.mxu0 0.0
    %1267 = vmatprep.subr.mxu0 0.0
    %1268 = vmatpush1.xpose.msra.mxu0 0.0
    %1269 = vmatprep.subr.mxu0 0.0
    %1270 = vmatpush1.xpose.msra.mxu0 0.0
    %1271 = vmatprep.subr.mxu0 0.0
    %1272 = vmatpush1.xpose.msra.mxu0 0.0
    %1273 = vmatprep.mubr.f32.mxu0 0.0
    %v1274 = vand.u32 %v1053, 4294901760
    %v1275 = vsub.f32 %v1053, %v1274
    %1276 = vmatmul.mubr.f32.gmra.mrb[0].mxu0 %v1275
    %v1277 = vpop.f32.mrb[0].mxu0
    %v1278 = vadd.f32 %v1204, %v1277
    %v1279 = vpop.f32.mrb[0].mxu0
    %1280 = vdwg.mxu0
    %1281 = vmatprep.subr.mxu0 0.0
    %v1282 = vand.u32 %v1053, 4294901760
    %1283 = vmatpush1.xpose.msra.mxu0 %v1282
    %1284 = vmatprep.subr.mxu0 0.0
    %1285 = vmatpush1.xpose.msra.mxu0 0.0
    %1286 = vmatprep.subr.mxu0 0.0
    %1287 = vmatpush1.xpose.msra.mxu0 0.0
    %1288 = vmatprep.subr.mxu0 0.0
    %1289 = vmatpush1.xpose.msra.mxu0 0.0
    %1290 = vmatprep.subr.mxu0 0.0
    %1291 = vmatpush1.xpose.msra.mxu0 0.0
    %1292 = vmatprep.subr.mxu0 0.0
    %1293 = vmatpush1.xpose.msra.mxu0 0.0
    %1294 = vmatprep.subr.mxu0 0.0
    %1295 = vmatpush1.xpose.msra.mxu0 0.0
    %1296 = vmatprep.subr.mxu0 0.0
    %1297 = vmatpush1.xpose.msra.mxu0 0.0
    %1298 = vmatprep.subr.mxu0 0.0
    %1299 = vmatpush1.xpose.msra.mxu0 0.0
    %1300 = vmatprep.subr.mxu0 0.0
    %1301 = vmatpush1.xpose.msra.mxu0 0.0
    %1302 = vmatprep.subr.mxu0 0.0
    %1303 = vmatpush1.xpose.msra.mxu0 0.0
    %1304 = vmatprep.subr.mxu0 0.0
    %1305 = vmatpush1.xpose.msra.mxu0 0.0
    %1306 = vmatprep.subr.mxu0 0.0
    %1307 = vmatpush1.xpose.msra.mxu0 0.0
    %1308 = vmatprep.subr.mxu0 0.0
    %1309 = vmatpush1.xpose.msra.mxu0 0.0
    %1310 = vmatprep.subr.mxu0 0.0
    %1311 = vmatpush1.xpose.msra.mxu0 0.0
    %1312 = vmatprep.subr.mxu0 0.0
    %1313 = vmatpush1.xpose.msra.mxu0 0.0
    %1314 = vmatprep.subr.mxu0 0.0
    %1315 = vmatpush1.xpose.msra.mxu0 0.0
    %1316 = vmatprep.subr.mxu0 0.0
    %1317 = vmatpush1.xpose.msra.mxu0 0.0
    %1318 = vmatprep.subr.mxu0 0.0
    %1319 = vmatpush1.xpose.msra.mxu0 0.0
    %1320 = vmatprep.subr.mxu0 0.0
    %1321 = vmatpush1.xpose.msra.mxu0 0.0
    %1322 = vmatprep.subr.mxu0 0.0
    %1323 = vmatpush1.xpose.msra.mxu0 0.0
    %1324 = vmatprep.subr.mxu0 0.0
    %1325 = vmatpush1.xpose.msra.mxu0 0.0
    %1326 = vmatprep.subr.mxu0 0.0
    %1327 = vmatpush1.xpose.msra.mxu0 0.0
    %1328 = vmatprep.subr.mxu0 0.0
    %1329 = vmatpush1.xpose.msra.mxu0 0.0
    %1330 = vmatprep.subr.mxu0 0.0
    %1331 = vmatpush1.xpose.msra.mxu0 0.0
    %1332 = vmatprep.subr.mxu0 0.0
    %1333 = vmatpush1.xpose.msra.mxu0 0.0
    %1334 = vmatprep.subr.mxu0 0.0
    %1335 = vmatpush1.xpose.msra.mxu0 0.0
    %1336 = vmatprep.subr.mxu0 0.0
    %1337 = vmatpush1.xpose.msra.mxu0 0.0
    %1338 = vmatprep.subr.mxu0 0.0
    %1339 = vmatpush1.xpose.msra.mxu0 0.0
    %1340 = vmatprep.subr.mxu0 0.0
    %1341 = vmatpush1.xpose.msra.mxu0 0.0
    %1342 = vmatprep.subr.mxu0 0.0
    %1343 = vmatpush1.xpose.msra.mxu0 0.0
    %1344 = vmatprep.subr.mxu0 0.0
    %1345 = vmatpush1.xpose.msra.mxu0 0.0
    %1346 = vmatprep.mubr.f32.mxu0 0.0
    %v1347 = vand.u32 %v1053, 4294901760
    %v1348 = vsub.f32 %v1053, %v1347
    %v1349 = vand.u32 %v1348, 4294901760
    %1350 = vmatmul.mubr.f32.gmra.mrb[0].mxu0 %v1349
    %v1351 = vpop.f32.mrb[0].mxu0
    %v1352 = vadd.f32 %v1278, %v1351
    %v1353 = vpop.f32.mrb[0].mxu0
    %1354 = vdwg.mxu0
    %1355 = vmatprep.subr.mxu0 0.0
    %v1356 = vand.u32 %v1053, 4294901760
    %v1357 = vsub.f32 %v1053, %v1356
    %v1358 = vand.u32 %v1357, 4294901760
    %1359 = vmatpush1.xpose.msra.mxu0 %v1358
    %1360 = vmatprep.subr.mxu0 0.0
    %1361 = vmatpush1.xpose.msra.mxu0 0.0
    %1362 = vmatprep.subr.mxu0 0.0
    %1363 = vmatpush1.xpose.msra.mxu0 0.0
    %1364 = vmatprep.subr.mxu0 0.0
    %1365 = vmatpush1.xpose.msra.mxu0 0.0
    %1366 = vmatprep.subr.mxu0 0.0
    %1367 = vmatpush1.xpose.msra.mxu0 0.0
    %1368 = vmatprep.subr.mxu0 0.0
    %1369 = vmatpush1.xpose.msra.mxu0 0.0
    %1370 = vmatprep.subr.mxu0 0.0
    %1371 = vmatpush1.xpose.msra.mxu0 0.0
    %1372 = vmatprep.subr.mxu0 0.0
    %1373 = vmatpush1.xpose.msra.mxu0 0.0
    %1374 = vmatprep.subr.mxu0 0.0
    %1375 = vmatpush1.xpose.msra.mxu0 0.0
    %1376 = vmatprep.subr.mxu0 0.0
    %1377 = vmatpush1.xpose.msra.mxu0 0.0
    %1378 = vmatprep.subr.mxu0 0.0
    %1379 = vmatpush1.xpose.msra.mxu0 0.0
    %1380 = vmatprep.subr.mxu0 0.0
    %1381 = vmatpush1.xpose.msra.mxu0 0.0
    %1382 = vmatprep.subr.mxu0 0.0
    %1383 = vmatpush1.xpose.msra.mxu0 0.0
    %1384 = vmatprep.subr.mxu0 0.0
    %1385 = vmatpush1.xpose.msra.mxu0 0.0
    %1386 = vmatprep.subr.mxu0 0.0
    %1387 = vmatpush1.xpose.msra.mxu0 0.0
    %1388 = vmatprep.subr.mxu0 0.0
    %1389 = vmatpush1.xpose.msra.mxu0 0.0
    %1390 = vmatprep.subr.mxu0 0.0
    %1391 = vmatpush1.xpose.msra.mxu0 0.0
    %1392 = vmatprep.subr.mxu0 0.0
    %1393 = vmatpush1.xpose.msra.mxu0 0.0
    %1394 = vmatprep.subr.mxu0 0.0
    %1395 = vmatpush1.xpose.msra.mxu0 0.0
    %1396 = vmatprep.subr.mxu0 0.0
    %1397 = vmatpush1.xpose.msra.mxu0 0.0
    %1398 = vmatprep.subr.mxu0 0.0
    %1399 = vmatpush1.xpose.msra.mxu0 0.0
    %1400 = vmatprep.subr.mxu0 0.0
    %1401 = vmatpush1.xpose.msra.mxu0 0.0
    %1402 = vmatprep.subr.mxu0 0.0
    %1403 = vmatpush1.xpose.msra.mxu0 0.0
    %1404 = vmatprep.subr.mxu0 0.0
    %1405 = vmatpush1.xpose.msra.mxu0 0.0
    %1406 = vmatprep.subr.mxu0 0.0
    %1407 = vmatpush1.xpose.msra.mxu0 0.0
    %1408 = vmatprep.subr.mxu0 0.0
    %1409 = vmatpush1.xpose.msra.mxu0 0.0
    %1410 = vmatprep.subr.mxu0 0.0
    %1411 = vmatpush1.xpose.msra.mxu0 0.0
    %1412 = vmatprep.subr.mxu0 0.0
    %1413 = vmatpush1.xpose.msra.mxu0 0.0
    %1414 = vmatprep.subr.mxu0 0.0
    %1415 = vmatpush1.xpose.msra.mxu0 0.0
    %1416 = vmatprep.subr.mxu0 0.0
    %1417 = vmatpush1.xpose.msra.mxu0 0.0
    %1418 = vmatprep.subr.mxu0 0.0
    %1419 = vmatpush1.xpose.msra.mxu0 0.0
    %1420 = vmatprep.subr.mxu0 0.0
    %1421 = vmatpush1.xpose.msra.mxu0 0.0
    %1422 = vmatprep.mubr.f32.mxu0 0.0
    %v1423 = vand.u32 %v1053, 4294901760
    %1424 = vmatmul.mubr.f32.gmra.mrb[0].mxu0 %v1423
    %v1425 = vpop.f32.mrb[0].mxu0
    %v1426 = vadd.f32 %v1352, %v1425
    %v1427 = vpop.f32.mrb[0].mxu0
    %1428 = vdwg.mxu0
    %1429 = vmatprep.subr.mxu0 0.0
    %v1430 = vand.u32 %v1053, 4294901760
    %1431 = vmatpush1.xpose.msra.mxu0 %v1430
    %1432 = vmatprep.subr.mxu0 0.0
    %1433 = vmatpush1.xpose.msra.mxu0 0.0
    %1434 = vmatprep.subr.mxu0 0.0
    %1435 = vmatpush1.xpose.msra.mxu0 0.0
    %1436 = vmatprep.subr.mxu0 0.0
    %1437 = vmatpush1.xpose.msra.mxu0 0.0
    %1438 = vmatprep.subr.mxu0 0.0
    %1439 = vmatpush1.xpose.msra.mxu0 0.0
    %1440 = vmatprep.subr.mxu0 0.0
    %1441 = vmatpush1.xpose.msra.mxu0 0.0
    %1442 = vmatprep.subr.mxu0 0.0
    %1443 = vmatpush1.xpose.msra.mxu0 0.0
    %1444 = vmatprep.subr.mxu0 0.0
    %1445 = vmatpush1.xpose.msra.mxu0 0.0
    %1446 = vmatprep.subr.mxu0 0.0
    %1447 = vmatpush1.xpose.msra.mxu0 0.0
    %1448 = vmatprep.subr.mxu0 0.0
    %1449 = vmatpush1.xpose.msra.mxu0 0.0
    %1450 = vmatprep.subr.mxu0 0.0
    %1451 = vmatpush1.xpose.msra.mxu0 0.0
    %1452 = vmatprep.subr.mxu0 0.0
    %1453 = vmatpush1.xpose.msra.mxu0 0.0
    %1454 = vmatprep.subr.mxu0 0.0
    %1455 = vmatpush1.xpose.msra.mxu0 0.0
    %1456 = vmatprep.subr.mxu0 0.0
    %1457 = vmatpush1.xpose.msra.mxu0 0.0
    %1458 = vmatprep.subr.mxu0 0.0
    %1459 = vmatpush1.xpose.msra.mxu0 0.0
    %1460 = vmatprep.subr.mxu0 0.0
    %1461 = vmatpush1.xpose.msra.mxu0 0.0
    %1462 = vmatprep.subr.mxu0 0.0
    %1463 = vmatpush1.xpose.msra.mxu0 0.0
    %1464 = vmatprep.subr.mxu0 0.0
    %1465 = vmatpush1.xpose.msra.mxu0 0.0
    %1466 = vmatprep.subr.mxu0 0.0
    %1467 = vmatpush1.xpose.msra.mxu0 0.0
    %1468 = vmatprep.subr.mxu0 0.0
    %1469 = vmatpush1.xpose.msra.mxu0 0.0
    %1470 = vmatprep.subr.mxu0 0.0
    %1471 = vmatpush1.xpose.msra.mxu0 0.0
    %1472 = vmatprep.subr.mxu0 0.0
    %1473 = vmatpush1.xpose.msra.mxu0 0.0
    %1474 = vmatprep.subr.mxu0 0.0
    %1475 = vmatpush1.xpose.msra.mxu0 0.0
    %1476 = vmatprep.subr.mxu0 0.0
    %1477 = vmatpush1.xpose.msra.mxu0 0.0
    %1478 = vmatprep.subr.mxu0 0.0
    %1479 = vmatpush1.xpose.msra.mxu0 0.0
    %1480 = vmatprep.subr.mxu0 0.0
    %1481 = vmatpush1.xpose.msra.mxu0 0.0
    %1482 = vmatprep.subr.mxu0 0.0
    %1483 = vmatpush1.xpose.msra.mxu0 0.0
    %1484 = vmatprep.subr.mxu0 0.0
    %1485 = vmatpush1.xpose.msra.mxu0 0.0
    %1486 = vmatprep.subr.mxu0 0.0
    %1487 = vmatpush1.xpose.msra.mxu0 0.0
    %1488 = vmatprep.subr.mxu0 0.0
    %1489 = vmatpush1.xpose.msra.mxu0 0.0
    %1490 = vmatprep.subr.mxu0 0.0
    %1491 = vmatpush1.xpose.msra.mxu0 0.0
    %1492 = vmatprep.subr.mxu0 0.0
    %1493 = vmatpush1.xpose.msra.mxu0 0.0
    %1494 = vmatprep.mubr.f32.mxu0 0.0
    %v1495 = vand.u32 %v1053, 4294901760
    %1496 = vmatmul.mubr.f32.gmra.mrb[0].mxu0 %v1495
    %v1497 = vpop.f32.mrb[0].mxu0
    %v1498 = vadd.f32 %v1426, %v1497
    %v1499 = vpop.f32.mrb[0].mxu0
    %1500 = vdwg.mxu0
    %v1501 = vlaneseq
    %v1502 = vshrl.u32 %v1501, 7
    %v1503 = vlaneseq
    %v1504 = vand.u32 %v1503, 127
    %vm1505 = vcmp.eq.s32.totalorder %v1502, %v1504
    %v1506 = vsub.f32 %v1049, 1e+08
    %v1507 = vsub.f32 %v1498, 1e+08
    %v1508 = vsel %vm1505, 1, 0
    %vm1509 = vcmp.eq.s32.totalorder %v1508, 1
    %v1510 = vsel %vm1509, %v1506, %v1049
    %v1511 = vsel %vm1509, %v1507, %v1498
    %v1512 = vmul.f32 %v1510, 0.01
    %v1513 = vmul.f32 %v1511, 0.01
    %v1514 = vmax.f32 %v1510, %v1512
    %v1515 = vmax.f32 %v1511, %v1513
    %vm1516 = vcmask 64512
    %v1517 = vsel %vm1516, %v1514, -inf
    %1518 = vmax.xlane.f32.xlu0 %v1517
    %v1519 = vpop.xlane.xlu0 %1518
    %v1520 = vsel %vm1516, %v1515, -inf
    %1521 = vmax.xlane.f32.xlu0 %v1520
    %v1522 = vpop.xlane.xlu0 %1521
    %v1523 = vsub.f32 %v1514, %v1519
    %v1524 = vsub.f32 %v1515, %v1522
    %v1525 = vmul.f32 %v1523, 1.442695
    %v1526 = vpow.pop %v1525
    %v1527 = vmul.f32 %v1524, 1.442695
    %v1528 = vpow.pop %v1527
    %v1529 = vsel %vm1516, %v1526, 0.0
    %1530 = vadd.xlane.f32.xlu0 %v1529
    %v1531 = vpop.xlane.xlu0 %1530
    %v1532 = vsel %vm1516, %v1528, 0.0
    %1533 = vadd.xlane.f32.xlu0 %v1532
    %v1534 = vpop.xlane.xlu0 %1533
    %v1535 = vrcp.pop %v1531
    %v1536 = vmul.f32 %v1526, %v1535
    %v1537 = vrcp.pop %v1534
    %v1538 = vmul.f32 %v1528, %v1537
    %v1539 = vadd.f32 %v1536, 1.0
    %v1540 = vadd.f32 %v1538, 1.0
    %v1541 = vsel %vm1509, %v1539, %v1536
    %v1542 = vsel %vm1509, %v1540, %v1538
    %1543 = vst.msk [vmem:[#allocation7] sm:$0xff] %vm1516, %v1541
    %1544 = vst.msk [vmem:[#allocation7 + $0x8] sm:$0xff] %vm1516, %v1542
    // Predicated region
    $region22: #{tpu_custom_call.1} parent=1 // pred_check
      _
    $region23: #{tpu_custom_call.1} parent=1 // pred_check_branch
      %1546 = sbr.rel (0) target = $region25
    $region24: #{tpu_custom_call.1} parent=1 // pred_region
      %s1548 = ssub.s32 256, 256
      %1549 = vsyncadd [#allocation4], %s1548
      %s1550 = sshll.u32 [#allocation7], 4
      %s1551 = int_to_ptr.vmem [resolvable:$true] %s1550
      %1556 = dma.vmem_to_hbm [thread:$0]  %s1551, 256, %s3, [#allocation4], 128, 128, 8
    $region25: #{tpu_custom_call.1} parent=1 // pred_fallthru
      _
    // Predicated region
    $region26: #{tpu_custom_call.1} parent=1 // pred_check
      _
    $region27: #{tpu_custom_call.1} parent=1 // pred_check_branch
      %1558 = sbr.rel (0) target = $region29
    $region28: #{tpu_custom_call.1} parent=1 // pred_region
      %1559 = dma.done [#allocation4], 256
    $region29: #{tpu_custom_call.1} parent=1 // pred_fallthru
      _
    %1560 = vsyncpa [#allocation3], 1
    %1561 = vsyncpa [#allocation6], 1
    %1562 = vsyncpa [#allocation4], 1

</llo_original>
